<compile_context>
chip_gen: v6e
topology: v6e:2x2x1
jax: 0.10.0
libtpu: 0.0.40
codegen_flags: <defaults>
</compile_context>

<pallas_src>
import jax
import jax.numpy as jnp
from jax.experimental import pallas as pl
from jax.experimental.pallas import tpu as pltpu

NEG_SLOPE = 0.2
D_IN = 28 * 28          # 784
H1 = 512
H2 = 256
OUT_PAD = 128           # lane-dense padded width for the final Linear(256, 1)


def _disc_kernel(x_ref, w1_ref, b1_ref, w2_ref, b2_ref, w3_ref, b3_ref, o_ref):
    # Layer 1: Linear(784 -> 512) + LeakyReLU(0.2).  bf16 operands, f32 accumulate.
    h1 = jnp.dot(x_ref[...], w1_ref[...], preferred_element_type=jnp.float32)
    h1 = h1 + b1_ref[...]                       # (1, 512) broadcasts over the batch tile
    h1 = jnp.where(h1 > 0, h1, NEG_SLOPE * h1)

    # Dropout(p): identity in eval mode.
    # TODO(synk): training-mode dropout (pltpu.prng_seed / prng_random_bits mask) not implemented.

    # Layer 2: Linear(512 -> 256) + LeakyReLU(0.2)
    h2 = jnp.dot(h1.astype(jnp.bfloat16), w2_ref[...],
                 preferred_element_type=jnp.float32)
    h2 = h2 + b2_ref[...]
    h2 = jnp.where(h2 > 0, h2, NEG_SLOPE * h2)

    # Layer 3: Linear(256 -> 1), zero-padded to 128 output lanes, + Sigmoid.
    logits = jnp.dot(h2.astype(jnp.bfloat16), w3_ref[...],
                     preferred_element_type=jnp.float32)
    logits = logits + b3_ref[...]
    o_ref[...] = jax.nn.sigmoid(logits).astype(o_ref.dtype)


def _round_up(x, m):
    return (x + m - 1) // m * m


def discriminator_forward(img, params, *, tile_m=1024):
    """img: (B, 1, 28, 28) float32 NCHW. Returns (B, 1) scores in (0, 1)."""
    w1, b1, w2, b2, w3, b3 = params
    B = img.shape[0]
    x = img.reshape(B, D_IN)                    # glue: flatten, matches img.view(-1, 784)

    # bf16 matmul operands; biases stay f32 (f32 accumulation / activations in-kernel).
    x = x.astype(jnp.bfloat16)
    w1 = w1.astype(jnp.bfloat16)
    w2 = w2.astype(jnp.bfloat16)
    # Pad the degenerate (256, 1) final layer to 128 lanes -> lane-dense output tile.
    w3p = jnp.zeros((H2, OUT_PAD), jnp.bfloat16).at[:, :1].set(w3.astype(jnp.bfloat16))
    b3p = jnp.zeros((1, OUT_PAD), jnp.float32).at[:, :1].set(b3)

    # Batch tiling: shrink TM for small batches, pad B up to a TM multiple so every
    # grid step sees full (8,128)-aligned tiles (no ragged tail).
    tm = min(tile_m, _round_up(B, 8))
    B_pad = _round_up(B, tm)
    if B_pad != B:
        x = jnp.pad(x, ((0, B_pad - B), (0, 0)))

    out = pl.pallas_call(
        _disc_kernel,
        out_shape=jax.ShapeDtypeStruct((B_pad, OUT_PAD), jnp.float32),
        grid=(B_pad // tm,),
        in_specs=[
            pl.BlockSpec((tm, D_IN), lambda i: (i, 0)),       # x: streamed per batch tile
            pl.BlockSpec((D_IN, H1), lambda i: (0, 0)),       # w1: resident in VMEM
            pl.BlockSpec((1, H1), lambda i: (0, 0)),          # b1
            pl.BlockSpec((H1, H2), lambda i: (0, 0)),         # w2
            pl.BlockSpec((1, H2), lambda i: (0, 0)),          # b2
            pl.BlockSpec((H2, OUT_PAD), lambda i: (0, 0)),    # w3 (padded, resident)
            pl.BlockSpec((1, OUT_PAD), lambda i: (0, 0)),     # b3 (padded)
        ],
        out_specs=pl.BlockSpec((tm, OUT_PAD), lambda i: (i, 0)),
        compiler_params=pltpu.CompilerParams(
            dimension_semantics=("parallel",),                # 2-TC shard on v7x; no-op on v5e/v6e
            vmem_limit_bytes=48 * 1024 * 1024,                # headroom incl. double-buffered x tiles
        ),
    )(x, w1, b1, w2, b2, w3p, b3p)

    return out[:B, :1]                                        # slice the real score column


def init_params(key):
    """Deterministic init mimicking PyTorch nn.Linear default (uniform +/- 1/sqrt(fan_in))."""
    dims = [(D_IN, H1), (H1, H2), (H2, 1)]
    params = []
    keys = jax.random.split(key, 2 * len(dims))
    for i, (fan_in, fan_out) in enumerate(dims):
        bound = 1.0 / (fan_in ** 0.5)
        w = jax.random.uniform(keys[2 * i], (fan_in, fan_out),
                               minval=-bound, maxval=bound, dtype=jnp.float32)
        b = jax.random.uniform(keys[2 * i + 1], (1, fan_out),
                               minval=-bound, maxval=bound, dtype=jnp.float32)
        params.extend([w, b])
    return tuple(params)


def _reference_forward(img, params):
    """Pure-JAX f32 reference for sanity checking the kernel."""
    w1, b1, w2, b2, w3, b3 = params
    x = img.reshape(img.shape[0], -1)
    h = x @ w1 + b1
    h = jnp.where(h > 0, h, NEG_SLOPE * h)
    h = h @ w2 + b2
    h = jnp.where(h > 0, h, NEG_SLOPE * h)
    return jax.nn.sigmoid(h @ w3 + b3)


if __name__ == "__main__":
    key = jax.random.PRNGKey(0)
    k_img, k_param = jax.random.split(key)

    B = 2
    img = jax.random.normal(k_img, (B, 1, 28, 28), dtype=jnp.float32)
    params = init_params(k_param)

    out = discriminator_forward(img, params)
    out = jax.block_until_ready(out)

    ref = _reference_forward(img, params)
    assert out.shape == (B, 1), f"bad shape {out.shape}"
    # bf16 matmul operands -> loosened tolerance vs the f32 reference (expected).
    assert jnp.allclose(out, ref, atol=3e-2, rtol=3e-2), "mismatch vs reference"

    print("KERNEL_OK")
</pallas_src>

<mosaic_0001>
module attributes {stable_mosaic.version = 11 : i64} {
  func.func @_disc_kernel(%arg0: i32, %arg1: memref<8x784xbf16, #tpu.memory_space<vmem>>, %arg2: memref<784x512xbf16, #tpu.memory_space<vmem>>, %arg3: memref<1x512xf32, #tpu.memory_space<vmem>>, %arg4: memref<512x256xbf16, #tpu.memory_space<vmem>>, %arg5: memref<1x256xf32, #tpu.memory_space<vmem>>, %arg6: memref<256x128xbf16, #tpu.memory_space<vmem>>, %arg7: memref<1x128xf32, #tpu.memory_space<vmem>>, %arg8: memref<8x128xf32, #tpu.memory_space<vmem>>) attributes {dimension_semantics = [#tpu.dimension_semantics<parallel>], iteration_bounds = array<i64: 1>, scalar_prefetch = 0 : i64, scratch_operands = 0 : i64, tpu.core_type = #tpu.core_type<tc>, window_params = [{transform_indices = @transform_0, window_bounds = array<i64: 8, 784>}, {pipeline_mode = #tpu.pipeline_mode<synchronous>, transform_indices = @transform_1, window_bounds = array<i64: 784, 512>}, {pipeline_mode = #tpu.pipeline_mode<synchronous>, transform_indices = @transform_2, window_bounds = array<i64: 1, 512>}, {pipeline_mode = #tpu.pipeline_mode<synchronous>, transform_indices = @transform_3, window_bounds = array<i64: 512, 256>}, {pipeline_mode = #tpu.pipeline_mode<synchronous>, transform_indices = @transform_4, window_bounds = array<i64: 1, 256>}, {pipeline_mode = #tpu.pipeline_mode<synchronous>, transform_indices = @transform_5, window_bounds = array<i64: 256, 128>}, {pipeline_mode = #tpu.pipeline_mode<synchronous>, transform_indices = @transform_6, window_bounds = array<i64: 1, 128>}, {transform_indices = @transform_7, window_bounds = array<i64: 8, 128>}]} {
    %c0 = arith.constant 0 : index
    %c0_0 = arith.constant 0 : index
    %0 = vector.load %arg1[%c0, %c0_0] : memref<8x784xbf16, #tpu.memory_space<vmem>>, vector<8x784xbf16>
    %c0_1 = arith.constant 0 : index
    %c0_2 = arith.constant 0 : index
    %1 = vector.load %arg2[%c0_1, %c0_2] : memref<784x512xbf16, #tpu.memory_space<vmem>>, vector<784x512xbf16>
    %cst = arith.constant dense<0.000000e+00> : vector<8x512xf32>
    %2 = tpu.matmul %0, %1, %cst {dimension_numbers = #tpu.dot_dimension_numbers<[1], [0], [0], [1], [0, 0, 1, 1], [], []>} : vector<8x784xbf16>, vector<784x512xbf16>, vector<8x512xf32> -> vector<8x512xf32>
    %c0_3 = arith.constant 0 : index
    %c0_4 = arith.constant 0 : index
    %3 = vector.load %arg3[%c0_3, %c0_4] : memref<1x512xf32, #tpu.memory_space<vmem>>, vector<1x512xf32>
    %4 = vector.broadcast %3 : vector<1x512xf32> to vector<8x512xf32>
    %5 = arith.addf %2, %4 : vector<8x512xf32>
    %cst_5 = arith.constant 0.000000e+00 : f32
    %6 = vector.broadcast %cst_5 : f32 to vector<8x512xf32>
    %7 = arith.cmpf ogt, %5, %6 : vector<8x512xf32>
    %cst_6 = arith.constant 2.000000e-01 : f32
    %8 = vector.broadcast %cst_6 : f32 to vector<8x512xf32>
    %9 = arith.mulf %8, %5 : vector<8x512xf32>
    %10 = arith.select %7, %5, %9 : vector<8x512xi1>, vector<8x512xf32>
    %11 = arith.truncf %10 : vector<8x512xf32> to vector<8x512xbf16>
    %c0_7 = arith.constant 0 : index
    %c0_8 = arith.constant 0 : index
    %12 = vector.load %arg4[%c0_7, %c0_8] : memref<512x256xbf16, #tpu.memory_space<vmem>>, vector<512x256xbf16>
    %cst_9 = arith.constant dense<0.000000e+00> : vector<8x256xf32>
    %13 = tpu.matmul %11, %12, %cst_9 {dimension_numbers = #tpu.dot_dimension_numbers<[1], [0], [0], [1], [0, 0, 1, 1], [], []>} : vector<8x512xbf16>, vector<512x256xbf16>, vector<8x256xf32> -> vector<8x256xf32>
    %c0_10 = arith.constant 0 : index
    %c0_11 = arith.constant 0 : index
    %14 = vector.load %arg5[%c0_10, %c0_11] : memref<1x256xf32, #tpu.memory_space<vmem>>, vector<1x256xf32>
    %15 = vector.broadcast %14 : vector<1x256xf32> to vector<8x256xf32>
    %16 = arith.addf %13, %15 : vector<8x256xf32>
    %cst_12 = arith.constant 0.000000e+00 : f32
    %17 = vector.broadcast %cst_12 : f32 to vector<8x256xf32>
    %18 = arith.cmpf ogt, %16, %17 : vector<8x256xf32>
    %cst_13 = arith.constant 2.000000e-01 : f32
    %19 = vector.broadcast %cst_13 : f32 to vector<8x256xf32>
    %20 = arith.mulf %19, %16 : vector<8x256xf32>
    %21 = arith.select %18, %16, %20 : vector<8x256xi1>, vector<8x256xf32>
    %22 = arith.truncf %21 : vector<8x256xf32> to vector<8x256xbf16>
    %c0_14 = arith.constant 0 : index
    %c0_15 = arith.constant 0 : index
    %23 = vector.load %arg6[%c0_14, %c0_15] : memref<256x128xbf16, #tpu.memory_space<vmem>>, vector<256x128xbf16>
    %cst_16 = arith.constant dense<0.000000e+00> : vector<8x128xf32>
    %24 = tpu.matmul %22, %23, %cst_16 {dimension_numbers = #tpu.dot_dimension_numbers<[1], [0], [0], [1], [0, 0, 1, 1], [], []>} : vector<8x256xbf16>, vector<256x128xbf16>, vector<8x128xf32> -> vector<8x128xf32>
    %c0_17 = arith.constant 0 : index
    %c0_18 = arith.constant 0 : index
    %25 = vector.load %arg7[%c0_17, %c0_18] : memref<1x128xf32, #tpu.memory_space<vmem>>, vector<1x128xf32>
    %26 = vector.broadcast %25 : vector<1x128xf32> to vector<8x128xf32>
    %27 = arith.addf %24, %26 : vector<8x128xf32>
    %28 = arith.negf %27 : vector<8x128xf32>
    %29 = math.exp %28 : vector<8x128xf32>
    %cst_19 = arith.constant 1.000000e+00 : f32
    %30 = vector.broadcast %cst_19 : f32 to vector<8x128xf32>
    %31 = arith.addf %30, %29 : vector<8x128xf32>
    %32 = arith.divf %30, %31 : vector<8x128xf32>
    %c0_20 = arith.constant 0 : index
    %c0_21 = arith.constant 0 : index
    %33 = vector.load %arg8[%c0_20, %c0_21] : memref<8x128xf32, #tpu.memory_space<vmem>>, vector<8x128xf32>
    tpu.vector_store %arg8[%c0_20, %c0_21], %32 {strides = array<i32>} : memref<8x128xf32, #tpu.memory_space<vmem>>, vector<8x128xf32>,
    return
  }
  func.func @transform_0(%arg0: i32) -> (i32, i32) {
    %c0_i32 = arith.constant 0 : i32
    %c0_i32_0 = arith.constant 0 : i32
    return %arg0, %c0_i32 : i32, i32
  }
  func.func @transform_1(%arg0: i32) -> (i32, i32) {
    %c0_i32 = arith.constant 0 : i32
    %c0_i32_0 = arith.constant 0 : i32
    %c0_i32_1 = arith.constant 0 : i32
    return %c0_i32, %c0_i32_0 : i32, i32
  }
  func.func @transform_2(%arg0: i32) -> (i32, i32) {
    %c0_i32 = arith.constant 0 : i32
    %c0_i32_0 = arith.constant 0 : i32
    %c0_i32_1 = arith.constant 0 : i32
    return %c0_i32, %c0_i32_0 : i32, i32
  }
  func.func @transform_3(%arg0: i32) -> (i32, i32) {
    %c0_i32 = arith.constant 0 : i32
    %c0_i32_0 = arith.constant 0 : i32
    %c0_i32_1 = arith.constant 0 : i32
    return %c0_i32, %c0_i32_0 : i32, i32
  }
  func.func @transform_4(%arg0: i32) -> (i32, i32) {
    %c0_i32 = arith.constant 0 : i32
    %c0_i32_0 = arith.constant 0 : i32
    %c0_i32_1 = arith.constant 0 : i32
    return %c0_i32, %c0_i32_0 : i32, i32
  }
  func.func @transform_5(%arg0: i32) -> (i32, i32) {
    %c0_i32 = arith.constant 0 : i32
    %c0_i32_0 = arith.constant 0 : i32
    %c0_i32_1 = arith.constant 0 : i32
    return %c0_i32, %c0_i32_0 : i32, i32
  }
  func.func @transform_6(%arg0: i32) -> (i32, i32) {
    %c0_i32 = arith.constant 0 : i32
    %c0_i32_0 = arith.constant 0 : i32
    %c0_i32_1 = arith.constant 0 : i32
    return %c0_i32, %c0_i32_0 : i32, i32
  }
  func.func @transform_7(%arg0: i32) -> (i32, i32) {
    %c0_i32 = arith.constant 0 : i32
    %c0_i32_0 = arith.constant 0 : i32
    return %arg0, %c0_i32 : i32, i32
  }
}

</mosaic_0001>

<llo_original>
// kernel: tpu_custom_call.1
$region0: #{tpu_custom_call.1}
  #allocation0 [shape = 'u32[]', space=smem, size = 0x4, offset = 0x4, fixed_abs, tag = 'smem constant byte address 0x4 - core index']
  #allocation1 [shape = 'u32[144,128]{1,0:T(1,128)}', space=vmem, size = 0x12000, scoped, tag = 'internal scratch']
  %s0 = inlined_call_operand.hbm [shape: bf16[8,784], index: 0, kind: input, shape index: {}]
  %s1 = inlined_call_operand.hbm [shape: bf16[784,512], index: 1, kind: input, shape index: {}]
  %s2 = inlined_call_operand.hbm [shape: f32[1,512], index: 2, kind: input, shape index: {}]
  %s3 = inlined_call_operand.hbm [shape: bf16[512,256], index: 3, kind: input, shape index: {}]
  %s4 = inlined_call_operand.vmem [shape: f32[1,256], index: 4, kind: input, shape index: {}]
  %s5 = inlined_call_operand.hbm [shape: bf16[256,128], index: 5, kind: input, shape index: {}]
  %s6 = inlined_call_operand.vmem [shape: f32[1,128], index: 6, kind: input, shape index: {}]
  %s7 = inlined_call_operand.hbm [shape: f32[8,128], index: 7, kind: output, shape index: {}]
  %s8 = sld [smem:[#allocation0]]
  $region58: #{tpu_custom_call.1} parent=0
    _
  %s10 = ssub.s32 1, %s8
  %s11 = scalar_select 0, %s10, %s8
  $region1: #{tpu_custom_call.1} parent=0
    #allocation2 [shape = 'u8[14336]{0}', space=vmem, size = 0x3800, scoped, tag = 'input window, operand 0, single buffered']
    #allocation3 [shape = 's32[1]{0}', space=sflag, size = 0x4, scoped, tag = 'scoped memory for tpu_custom_call.1']
    #allocation4 [shape = 's32[1]{0}', space=sflag, size = 0x4, scoped, tag = 'scoped memory for tpu_custom_call.1']
    #allocation5 [shape = 'u8[802816]{0}', space=vmem, size = 0xc4000, scoped, tag = 'input window, operand 1, single buffered']
    #allocation6 [shape = 's32[1]{0}', space=sflag, size = 0x4, scoped, tag = 'scoped memory for tpu_custom_call.1']
    #allocation7 [shape = 'u8[2048]{0}', space=vmem, size = 0x800, scoped, tag = 'input window, operand 2, single buffered']
    #allocation8 [shape = 'u8[262144]{0}', space=vmem, size = 0x40000, scoped, tag = 'input window, operand 3, single buffered']
    #allocation9 [shape = 's32[1]{0}', space=sflag, size = 0x4, scoped, tag = 'scoped memory for tpu_custom_call.1']
    #allocation10 [shape = 'u8[65536]{0}', space=vmem, size = 0x10000, scoped, tag = 'input window, operand 5, single buffered']
    #allocation11 [shape = 'u8[4096]{0}', space=vmem, size = 0x1000, scoped, tag = 'output window, operand 0, single buffered']
    %12 = vsyncpa [#allocation3], 0
    %13 = vsyncpa [#allocation6], 0
    %14 = vsyncpa [#allocation9], 0
    %15 = vsyncpa [#allocation4], 0
    // Predicated region
    $region2: #{tpu_custom_call.1} parent=1 // pred_check
      _
    $region3: #{tpu_custom_call.1} parent=1 // pred_check_branch
      %17 = sbr.rel (0) target = $region5
    $region4: #{tpu_custom_call.1} parent=1 // pred_region
      %s19 = ssub.s32 448, 448
      %20 = vsyncadd [#allocation3], %s19
      %s22 = sshll.u32 [#allocation2], 4
      %s23 = int_to_ptr.vmem [resolvable:$true] %s22
      %25 = dma.hbm_to_vmem [thread:$0]  %s0, 448, %s23, [#allocation3]
    $region5: #{tpu_custom_call.1} parent=1 // pred_fallthru
      _
    // Predicated region
    $region6: #{tpu_custom_call.1} parent=1 // pred_check
      _
    $region7: #{tpu_custom_call.1} parent=1 // pred_check_branch
      %27 = sbr.rel (0) target = $region9
    $region8: #{tpu_custom_call.1} parent=1 // pred_region
      %s29 = ssub.s32 25088, 25088
      %30 = vsyncadd [#allocation6], %s29
      %s31 = sshll.u32 [#allocation5], 4
      %s32 = int_to_ptr.vmem [resolvable:$true] %s31
      %37 = dma.hbm_to_vmem [thread:$0]  %s1, 25088, %s32, [#allocation6], 256, 256, 16
    $region9: #{tpu_custom_call.1} parent=1 // pred_fallthru
      _
    // Predicated region
    $region10: #{tpu_custom_call.1} parent=1 // pred_check
      _
    $region11: #{tpu_custom_call.1} parent=1 // pred_check_branch
      %39 = sbr.rel (0) target = $region13
    $region12: #{tpu_custom_call.1} parent=1 // pred_region
      %s41 = ssub.s32 64, 64
      %42 = vsyncadd [#allocation6], %s41
      %s44 = sshll.u32 [#allocation7], 4
      %s45 = int_to_ptr.vmem [resolvable:$true] %s44
      %47 = dma.hbm_to_vmem [thread:$0]  %s2, 64, %s45, [#allocation6]
    $region13: #{tpu_custom_call.1} parent=1 // pred_fallthru
      _
    // Predicated region
    $region14: #{tpu_custom_call.1} parent=1 // pred_check
      _
    $region15: #{tpu_custom_call.1} parent=1 // pred_check_branch
      %49 = sbr.rel (0) target = $region17
    $region16: #{tpu_custom_call.1} parent=1 // pred_region
      %s51 = ssub.s32 8192, 8192
      %52 = vsyncadd [#allocation9], %s51
      %s53 = sshll.u32 [#allocation8], 4
      %s54 = int_to_ptr.vmem [resolvable:$true] %s53
      %59 = dma.hbm_to_vmem [thread:$0]  %s3, 8192, %s54, [#allocation9], 128, 128, 8
    $region17: #{tpu_custom_call.1} parent=1 // pred_fallthru
      _
    // Predicated region
    $region18: #{tpu_custom_call.1} parent=1 // pred_check
      _
    $region19: #{tpu_custom_call.1} parent=1 // pred_check_branch
      %61 = sbr.rel (0) target = $region21
    $region20: #{tpu_custom_call.1} parent=1 // pred_region
      _
    $region21: #{tpu_custom_call.1} parent=1 // pred_fallthru
      _
    // Predicated region
    $region22: #{tpu_custom_call.1} parent=1 // pred_check
      _
    $region23: #{tpu_custom_call.1} parent=1 // pred_check_branch
      %63 = sbr.rel (0) target = $region25
    $region24: #{tpu_custom_call.1} parent=1 // pred_region
      %s65 = ssub.s32 2048, 2048
      %66 = vsyncadd [#allocation9], %s65
      %s67 = sshll.u32 [#allocation10], 4
      %s68 = int_to_ptr.vmem [resolvable:$true] %s67
      %73 = dma.hbm_to_vmem [thread:$0]  %s5, 2048, %s68, [#allocation9], 64, 64, 4
    $region25: #{tpu_custom_call.1} parent=1 // pred_fallthru
      _
    // Predicated region
    $region26: #{tpu_custom_call.1} parent=1 // pred_check
      _
    $region27: #{tpu_custom_call.1} parent=1 // pred_check_branch
      %75 = sbr.rel (0) target = $region29
    $region28: #{tpu_custom_call.1} parent=1 // pred_region
      _
    $region29: #{tpu_custom_call.1} parent=1 // pred_fallthru
      _
    // Predicated region
    $region30: #{tpu_custom_call.1} parent=1 // pred_check
      _
    $region31: #{tpu_custom_call.1} parent=1 // pred_check_branch
      %77 = sbr.rel (0) target = $region33
    $region32: #{tpu_custom_call.1} parent=1 // pred_region
      %78 = dma.done [#allocation3], 448
    $region33: #{tpu_custom_call.1} parent=1 // pred_fallthru
      _
    // Predicated region
    $region34: #{tpu_custom_call.1} parent=1 // pred_check
      _
    $region35: #{tpu_custom_call.1} parent=1 // pred_check_branch
      %80 = sbr.rel (0) target = $region37
    $region36: #{tpu_custom_call.1} parent=1 // pred_region
      %81 = dma.done [#allocation6], 25088
    $region37: #{tpu_custom_call.1} parent=1 // pred_fallthru
      _
    // Predicated region
    $region38: #{tpu_custom_call.1} parent=1 // pred_check
      _
    $region39: #{tpu_custom_call.1} parent=1 // pred_check_branch
      %83 = sbr.rel (0) target = $region41
    $region40: #{tpu_custom_call.1} parent=1 // pred_region
      %84 = dma.done [#allocation6], 64
    $region41: #{tpu_custom_call.1} parent=1 // pred_fallthru
      _
    // Predicated region
    $region42: #{tpu_custom_call.1} parent=1 // pred_check
      _
    $region43: #{tpu_custom_call.1} parent=1 // pred_check_branch
      %86 = sbr.rel (0) target = $region45
    $region44: #{tpu_custom_call.1} parent=1 // pred_region
      %87 = dma.done [#allocation9], 8192
    $region45: #{tpu_custom_call.1} parent=1 // pred_fallthru
      _
    // Predicated region
    $region46: #{tpu_custom_call.1} parent=1 // pred_check
      _
    $region47: #{tpu_custom_call.1} parent=1 // pred_check_branch
      %89 = sbr.rel (0) target = $region49
    $region48: #{tpu_custom_call.1} parent=1 // pred_region
      %90 = dma.done [#allocation9], 2048
    $region49: #{tpu_custom_call.1} parent=1 // pred_fallthru
      _
    %v92 = vld [vmem:[#allocation2] sm:$0xff]
    %v93 = vld [vmem:[#allocation2 + $0x8] sm:$0xff]
    %v94 = vld [vmem:[#allocation2 + $0x10] sm:$0xff]
    %v95 = vld [vmem:[#allocation2 + $0x18] sm:$0xf]
    %v96 = vld [vmem:[#allocation5] sm:$0xff]
    %v97 = vld [vmem:[#allocation5 + $0x8] sm:$0xff]
    %v98 = vld [vmem:[#allocation5 + $0x10] sm:$0xff]
    %v99 = vld [vmem:[#allocation5 + $0x18] sm:$0xff]
    %v100 = vld [vmem:[#allocation5 + $0x20] sm:$0xff]
    %v101 = vld [vmem:[#allocation5 + $0x28] sm:$0xff]
    %v102 = vld [vmem:[#allocation5 + $0x30] sm:$0xff]
    %v103 = vld [vmem:[#allocation5 + $0x38] sm:$0xff]
    %v104 = vld [vmem:[#allocation5 + $0x40] sm:$0xff]
    %v105 = vld [vmem:[#allocation5 + $0x48] sm:$0xff]
    %v106 = vld [vmem:[#allocation5 + $0x50] sm:$0xff]
    %v107 = vld [vmem:[#allocation5 + $0x58] sm:$0xff]
    %v108 = vld [vmem:[#allocation5 + $0x60] sm:$0xff]
    %v109 = vld [vmem:[#allocation5 + $0x68] sm:$0xff]
    %v110 = vld [vmem:[#allocation5 + $0x70] sm:$0xff]
    %v111 = vld [vmem:[#allocation5 + $0x78] sm:$0xff]
    %v112 = vld [vmem:[#allocation5 + $0x80] sm:$0xff]
    %v113 = vld [vmem:[#allocation5 + $0x88] sm:$0xff]
    %v114 = vld [vmem:[#allocation5 + $0x90] sm:$0xff]
    %v115 = vld [vmem:[#allocation5 + $0x98] sm:$0xff]
    %v116 = vld [vmem:[#allocation5 + $0xa0] sm:$0xff]
    %v117 = vld [vmem:[#allocation5 + $0xa8] sm:$0xff]
    %v118 = vld [vmem:[#allocation5 + $0xb0] sm:$0xff]
    %v119 = vld [vmem:[#allocation5 + $0xb8] sm:$0xff]
    %v120 = vld [vmem:[#allocation5 + $0xc0] sm:$0xff]
    %v121 = vld [vmem:[#allocation5 + $0xc8] sm:$0xff]
    %v122 = vld [vmem:[#allocation5 + $0xd0] sm:$0xff]
    %v123 = vld [vmem:[#allocation5 + $0xd8] sm:$0xff]
    %v124 = vld [vmem:[#allocation5 + $0xe0] sm:$0xff]
    %v125 = vld [vmem:[#allocation5 + $0xe8] sm:$0xff]
    %v126 = vld [vmem:[#allocation5 + $0xf0] sm:$0xff]
    %v127 = vld [vmem:[#allocation5 + $0xf8] sm:$0xff]
    %v128 = vld [vmem:[#allocation5 + $0x100] sm:$0xff]
    %v129 = vld [vmem:[#allocation5 + $0x108] sm:$0xff]
    %v130 = vld [vmem:[#allocation5 + $0x110] sm:$0xff]
    %v131 = vld [vmem:[#allocation5 + $0x118] sm:$0xff]
    %v132 = vld [vmem:[#allocation5 + $0x120] sm:$0xff]
    %v133 = vld [vmem:[#allocation5 + $0x128] sm:$0xff]
    %v134 = vld [vmem:[#allocation5 + $0x130] sm:$0xff]
    %v135 = vld [vmem:[#allocation5 + $0x138] sm:$0xff]
    %v136 = vld [vmem:[#allocation5 + $0x140] sm:$0xff]
    %v137 = vld [vmem:[#allocation5 + $0x148] sm:$0xff]
    %v138 = vld [vmem:[#allocation5 + $0x150] sm:$0xff]
    %v139 = vld [vmem:[#allocation5 + $0x158] sm:$0xff]
    %v140 = vld [vmem:[#allocation5 + $0x160] sm:$0xff]
    %v141 = vld [vmem:[#allocation5 + $0x168] sm:$0xff]
    %v142 = vld [vmem:[#allocation5 + $0x170] sm:$0xff]
    %v143 = vld [vmem:[#allocation5 + $0x178] sm:$0xff]
    %v144 = vld [vmem:[#allocation5 + $0x180] sm:$0xff]
    %v145 = vld [vmem:[#allocation5 + $0x188] sm:$0xff]
    %v146 = vld [vmem:[#allocation5 + $0x190] sm:$0xff]
    %v147 = vld [vmem:[#allocation5 + $0x198] sm:$0xff]
    %v148 = vld [vmem:[#allocation5 + $0x1a0] sm:$0xff]
    %v149 = vld [vmem:[#allocation5 + $0x1a8] sm:$0xff]
    %v150 = vld [vmem:[#allocation5 + $0x1b0] sm:$0xff]
    %v151 = vld [vmem:[#allocation5 + $0x1b8] sm:$0xff]
    %v152 = vld [vmem:[#allocation5 + $0x1c0] sm:$0xff]
    %v153 = vld [vmem:[#allocation5 + $0x1c8] sm:$0xff]
    %v154 = vld [vmem:[#allocation5 + $0x1d0] sm:$0xff]
    %v155 = vld [vmem:[#allocation5 + $0x1d8] sm:$0xff]
    %v156 = vld [vmem:[#allocation5 + $0x1e0] sm:$0xff]
    %v157 = vld [vmem:[#allocation5 + $0x1e8] sm:$0xff]
    %v158 = vld [vmem:[#allocation5 + $0x1f0] sm:$0xff]
    %v159 = vld [vmem:[#allocation5 + $0x1f8] sm:$0xff]
    %v160 = vld [vmem:[#allocation5 + $0x200] sm:$0xff]
    %v161 = vld [vmem:[#allocation5 + $0x208] sm:$0xff]
    %v162 = vld [vmem:[#allocation5 + $0x210] sm:$0xff]
    %v163 = vld [vmem:[#allocation5 + $0x218] sm:$0xff]
    %v164 = vld [vmem:[#allocation5 + $0x220] sm:$0xff]
    %v165 = vld [vmem:[#allocation5 + $0x228] sm:$0xff]
    %v166 = vld [vmem:[#allocation5 + $0x230] sm:$0xff]
    %v167 = vld [vmem:[#allocation5 + $0x238] sm:$0xff]
    %v168 = vld [vmem:[#allocation5 + $0x240] sm:$0xff]
    %v169 = vld [vmem:[#allocation5 + $0x248] sm:$0xff]
    %v170 = vld [vmem:[#allocation5 + $0x250] sm:$0xff]
    %v171 = vld [vmem:[#allocation5 + $0x258] sm:$0xff]
    %v172 = vld [vmem:[#allocation5 + $0x260] sm:$0xff]
    %v173 = vld [vmem:[#allocation5 + $0x268] sm:$0xff]
    %v174 = vld [vmem:[#allocation5 + $0x270] sm:$0xff]
    %v175 = vld [vmem:[#allocation5 + $0x278] sm:$0xff]
    %v176 = vld [vmem:[#allocation5 + $0x280] sm:$0xff]
    %v177 = vld [vmem:[#allocation5 + $0x288] sm:$0xff]
    %v178 = vld [vmem:[#allocation5 + $0x290] sm:$0xff]
    %v179 = vld [vmem:[#allocation5 + $0x298] sm:$0xff]
    %v180 = vld [vmem:[#allocation5 + $0x2a0] sm:$0xff]
    %v181 = vld [vmem:[#allocation5 + $0x2a8] sm:$0xff]
    %v182 = vld [vmem:[#allocation5 + $0x2b0] sm:$0xff]
    %v183 = vld [vmem:[#allocation5 + $0x2b8] sm:$0xff]
    %v184 = vld [vmem:[#allocation5 + $0x2c0] sm:$0xff]
    %v185 = vld [vmem:[#allocation5 + $0x2c8] sm:$0xff]
    %v186 = vld [vmem:[#allocation5 + $0x2d0] sm:$0xff]
    %v187 = vld [vmem:[#allocation5 + $0x2d8] sm:$0xff]
    %v188 = vld [vmem:[#allocation5 + $0x2e0] sm:$0xff]
    %v189 = vld [vmem:[#allocation5 + $0x2e8] sm:$0xff]
    %v190 = vld [vmem:[#allocation5 + $0x2f0] sm:$0xff]
    %v191 = vld [vmem:[#allocation5 + $0x2f8] sm:$0xff]
    %v192 = vld [vmem:[#allocation5 + $0x300] sm:$0xff]
    %v193 = vld [vmem:[#allocation5 + $0x308] sm:$0xff]
    %v194 = vld [vmem:[#allocation5 + $0x310] sm:$0xff]
    %v195 = vld [vmem:[#allocation5 + $0x318] sm:$0xff]
    %v196 = vld [vmem:[#allocation5 + $0x320] sm:$0xff]
    %v197 = vld [vmem:[#allocation5 + $0x328] sm:$0xff]
    %v198 = vld [vmem:[#allocation5 + $0x330] sm:$0xff]
    %v199 = vld [vmem:[#allocation5 + $0x338] sm:$0xff]
    %v200 = vld [vmem:[#allocation5 + $0x340] sm:$0xff]
    %v201 = vld [vmem:[#allocation5 + $0x348] sm:$0xff]
    %v202 = vld [vmem:[#allocation5 + $0x350] sm:$0xff]
    %v203 = vld [vmem:[#allocation5 + $0x358] sm:$0xff]
    %v204 = vld [vmem:[#allocation5 + $0x360] sm:$0xff]
    %v205 = vld [vmem:[#allocation5 + $0x368] sm:$0xff]
    %v206 = vld [vmem:[#allocation5 + $0x370] sm:$0xff]
    %v207 = vld [vmem:[#allocation5 + $0x378] sm:$0xff]
    %v208 = vld [vmem:[#allocation5 + $0x380] sm:$0xff]
    %v209 = vld [vmem:[#allocation5 + $0x388] sm:$0xff]
    %v210 = vld [vmem:[#allocation5 + $0x390] sm:$0xff]
    %v211 = vld [vmem:[#allocation5 + $0x398] sm:$0xff]
    %v212 = vld [vmem:[#allocation5 + $0x3a0] sm:$0xff]
    %v213 = vld [vmem:[#allocation5 + $0x3a8] sm:$0xff]
    %v214 = vld [vmem:[#allocation5 + $0x3b0] sm:$0xff]
    %v215 = vld [vmem:[#allocation5 + $0x3b8] sm:$0xff]
    %v216 = vld [vmem:[#allocation5 + $0x3c0] sm:$0xff]
    %v217 = vld [vmem:[#allocation5 + $0x3c8] sm:$0xff]
    %v218 = vld [vmem:[#allocation5 + $0x3d0] sm:$0xff]
    %v219 = vld [vmem:[#allocation5 + $0x3d8] sm:$0xff]
    %v220 = vld [vmem:[#allocation5 + $0x3e0] sm:$0xff]
    %v221 = vld [vmem:[#allocation5 + $0x3e8] sm:$0xff]
    %v222 = vld [vmem:[#allocation5 + $0x3f0] sm:$0xff]
    %v223 = vld [vmem:[#allocation5 + $0x3f8] sm:$0xff]
    %v224 = vld [vmem:[#allocation5 + $0x400] sm:$0xff]
    %v225 = vld [vmem:[#allocation5 + $0x408] sm:$0xff]
    %v226 = vld [vmem:[#allocation5 + $0x410] sm:$0xff]
    %v227 = vld [vmem:[#allocation5 + $0x418] sm:$0xff]
    %v228 = vld [vmem:[#allocation5 + $0x420] sm:$0xff]
    %v229 = vld [vmem:[#allocation5 + $0x428] sm:$0xff]
    %v230 = vld [vmem:[#allocation5 + $0x430] sm:$0xff]
    %v231 = vld [vmem:[#allocation5 + $0x438] sm:$0xff]
    %v232 = vld [vmem:[#allocation5 + $0x440] sm:$0xff]
    %v233 = vld [vmem:[#allocation5 + $0x448] sm:$0xff]
    %v234 = vld [vmem:[#allocation5 + $0x450] sm:$0xff]
    %v235 = vld [vmem:[#allocation5 + $0x458] sm:$0xff]
    %v236 = vld [vmem:[#allocation5 + $0x460] sm:$0xff]
    %v237 = vld [vmem:[#allocation5 + $0x468] sm:$0xff]
    %v238 = vld [vmem:[#allocation5 + $0x470] sm:$0xff]
    %v239 = vld [vmem:[#allocation5 + $0x478] sm:$0xff]
    %v240 = vld [vmem:[#allocation5 + $0x480] sm:$0xff]
    %v241 = vld [vmem:[#allocation5 + $0x488] sm:$0xff]
    %v242 = vld [vmem:[#allocation5 + $0x490] sm:$0xff]
    %v243 = vld [vmem:[#allocation5 + $0x498] sm:$0xff]
    %v244 = vld [vmem:[#allocation5 + $0x4a0] sm:$0xff]
    %v245 = vld [vmem:[#allocation5 + $0x4a8] sm:$0xff]
    %v246 = vld [vmem:[#allocation5 + $0x4b0] sm:$0xff]
    %v247 = vld [vmem:[#allocation5 + $0x4b8] sm:$0xff]
    %v248 = vld [vmem:[#allocation5 + $0x4c0] sm:$0xff]
    %v249 = vld [vmem:[#allocation5 + $0x4c8] sm:$0xff]
    %v250 = vld [vmem:[#allocation5 + $0x4d0] sm:$0xff]
    %v251 = vld [vmem:[#allocation5 + $0x4d8] sm:$0xff]
    %v252 = vld [vmem:[#allocation5 + $0x4e0] sm:$0xff]
    %v253 = vld [vmem:[#allocation5 + $0x4e8] sm:$0xff]
    %v254 = vld [vmem:[#allocation5 + $0x4f0] sm:$0xff]
    %v255 = vld [vmem:[#allocation5 + $0x4f8] sm:$0xff]
    %v256 = vld [vmem:[#allocation5 + $0x500] sm:$0xff]
    %v257 = vld [vmem:[#allocation5 + $0x508] sm:$0xff]
    %v258 = vld [vmem:[#allocation5 + $0x510] sm:$0xff]
    %v259 = vld [vmem:[#allocation5 + $0x518] sm:$0xff]
    %v260 = vld [vmem:[#allocation5 + $0x520] sm:$0xff]
    %v261 = vld [vmem:[#allocation5 + $0x528] sm:$0xff]
    %v262 = vld [vmem:[#allocation5 + $0x530] sm:$0xff]
    %v263 = vld [vmem:[#allocation5 + $0x538] sm:$0xff]
    %v264 = vld [vmem:[#allocation5 + $0x540] sm:$0xff]
    %v265 = vld [vmem:[#allocation5 + $0x548] sm:$0xff]
    %v266 = vld [vmem:[#allocation5 + $0x550] sm:$0xff]
    %v267 = vld [vmem:[#allocation5 + $0x558] sm:$0xff]
    %v268 = vld [vmem:[#allocation5 + $0x560] sm:$0xff]
    %v269 = vld [vmem:[#allocation5 + $0x568] sm:$0xff]
    %v270 = vld [vmem:[#allocation5 + $0x570] sm:$0xff]
    %v271 = vld [vmem:[#allocation5 + $0x578] sm:$0xff]
    %v272 = vld [vmem:[#allocation5 + $0x580] sm:$0xff]
    %v273 = vld [vmem:[#allocation5 + $0x588] sm:$0xff]
    %v274 = vld [vmem:[#allocation5 + $0x590] sm:$0xff]
    %v275 = vld [vmem:[#allocation5 + $0x598] sm:$0xff]
    %v276 = vld [vmem:[#allocation5 + $0x5a0] sm:$0xff]
    %v277 = vld [vmem:[#allocation5 + $0x5a8] sm:$0xff]
    %v278 = vld [vmem:[#allocation5 + $0x5b0] sm:$0xff]
    %v279 = vld [vmem:[#allocation5 + $0x5b8] sm:$0xff]
    %v280 = vld [vmem:[#allocation5 + $0x5c0] sm:$0xff]
    %v281 = vld [vmem:[#allocation5 + $0x5c8] sm:$0xff]
    %v282 = vld [vmem:[#allocation5 + $0x5d0] sm:$0xff]
    %v283 = vld [vmem:[#allocation5 + $0x5d8] sm:$0xff]
    %v284 = vld [vmem:[#allocation5 + $0x5e0] sm:$0xff]
    %v285 = vld [vmem:[#allocation5 + $0x5e8] sm:$0xff]
    %v286 = vld [vmem:[#allocation5 + $0x5f0] sm:$0xff]
    %v287 = vld [vmem:[#allocation5 + $0x5f8] sm:$0xff]
    %v288 = vld [vmem:[#allocation5 + $0x600] sm:$0xff]
    %v289 = vld [vmem:[#allocation5 + $0x608] sm:$0xff]
    %v290 = vld [vmem:[#allocation5 + $0x610] sm:$0xff]
    %v291 = vld [vmem:[#allocation5 + $0x618] sm:$0xff]
    %v292 = vld [vmem:[#allocation7] sm:$0xf]
    %v294 = vlaneseq
    %v295 = vshrl.u32 %v294, 7
    %v296 = vsub.s32 0, %v295
    %v297 = vrot.slane %v292, %v296
    %v298 = vlaneseq
    %v299 = vshrl.u32 %v298, 7
    %v300 = vsub.s32 1, %v299
    %v301 = vrot.slane %v292, %v300
    %v302 = vlaneseq
    %v303 = vshrl.u32 %v302, 7
    %v304 = vsub.s32 2, %v303
    %v305 = vrot.slane %v292, %v304
    %v306 = vlaneseq
    %v307 = vshrl.u32 %v306, 7
    %v308 = vsub.s32 3, %v307
    %v309 = vrot.slane %v292, %v308
    %v318 = vunpack.c.l.b16 %v92
    %v319 = vunpack.c.h.b16 %v92
    %v320 = vunpack.c.l.b16 %v93
    %v321 = vunpack.c.h.b16 %v93
    %v322 = vunpack.c.l.b16 %v94
    %v323 = vunpack.c.h.b16 %v94
    %v324 = vunpack.c.l.b16 %v95
    %v325 = vpack.c.b16 %v318, %v318
    %v326 = vpack.c.b16 %v319, %v319
    %v327 = vpack.c.b16 %v320, %v320
    %v328 = vpack.c.b16 %v321, %v321
    %v329 = vpack.c.b16 %v322, %v322
    %v330 = vpack.c.b16 %v323, %v323
    %v331 = vpack.c.b16 %v324, %v324
    %v534 = vunpack.c.l.b16 %v96
    %v535 = vunpack.c.h.b16 %v96
    %v536 = vunpack.c.l.b16 %v97
    %v537 = vunpack.c.h.b16 %v97
    %v538 = vunpack.c.l.b16 %v98
    %v539 = vunpack.c.h.b16 %v98
    %v540 = vunpack.c.l.b16 %v99
    %v541 = vunpack.c.h.b16 %v99
    %v542 = vunpack.c.l.b16 %v100
    %v543 = vunpack.c.h.b16 %v100
    %v544 = vunpack.c.l.b16 %v101
    %v545 = vunpack.c.h.b16 %v101
    %v546 = vunpack.c.l.b16 %v102
    %v547 = vunpack.c.h.b16 %v102
    %v548 = vunpack.c.l.b16 %v103
    %v549 = vunpack.c.h.b16 %v103
    %v550 = vunpack.c.l.b16 %v104
    %v551 = vunpack.c.h.b16 %v104
    %v552 = vunpack.c.l.b16 %v105
    %v553 = vunpack.c.h.b16 %v105
    %v554 = vunpack.c.l.b16 %v106
    %v555 = vunpack.c.h.b16 %v106
    %v556 = vunpack.c.l.b16 %v107
    %v557 = vunpack.c.h.b16 %v107
    %v558 = vunpack.c.l.b16 %v108
    %v559 = vunpack.c.h.b16 %v108
    %v560 = vunpack.c.l.b16 %v109
    %v561 = vunpack.c.h.b16 %v109
    %v562 = vunpack.c.l.b16 %v110
    %v563 = vunpack.c.h.b16 %v110
    %v564 = vunpack.c.l.b16 %v111
    %v565 = vunpack.c.h.b16 %v111
    %v566 = vunpack.c.l.b16 %v112
    %v567 = vunpack.c.h.b16 %v112
    %v568 = vunpack.c.l.b16 %v113
    %v569 = vunpack.c.h.b16 %v113
    %v570 = vunpack.c.l.b16 %v114
    %v571 = vunpack.c.h.b16 %v114
    %v572 = vunpack.c.l.b16 %v115
    %v573 = vunpack.c.h.b16 %v115
    %v574 = vunpack.c.l.b16 %v116
    %v575 = vunpack.c.h.b16 %v116
    %v576 = vunpack.c.l.b16 %v117
    %v577 = vunpack.c.h.b16 %v117
    %v578 = vunpack.c.l.b16 %v118
    %v579 = vunpack.c.h.b16 %v118
    %v580 = vunpack.c.l.b16 %v119
    %v581 = vunpack.c.h.b16 %v119
    %v582 = vunpack.c.l.b16 %v120
    %v583 = vunpack.c.h.b16 %v120
    %v584 = vunpack.c.l.b16 %v121
    %v585 = vunpack.c.h.b16 %v121
    %v586 = vunpack.c.l.b16 %v122
    %v587 = vunpack.c.h.b16 %v122
    %v588 = vunpack.c.l.b16 %v123
    %v589 = vunpack.c.h.b16 %v123
    %v590 = vunpack.c.l.b16 %v124
    %v591 = vunpack.c.h.b16 %v124
    %v592 = vunpack.c.l.b16 %v125
    %v593 = vunpack.c.h.b16 %v125
    %v594 = vunpack.c.l.b16 %v126
    %v595 = vunpack.c.h.b16 %v126
    %v596 = vunpack.c.l.b16 %v127
    %v597 = vunpack.c.h.b16 %v127
    %v598 = vunpack.c.l.b16 %v128
    %v599 = vunpack.c.h.b16 %v128
    %v600 = vunpack.c.l.b16 %v129
    %v601 = vunpack.c.h.b16 %v129
    %v602 = vunpack.c.l.b16 %v130
    %v603 = vunpack.c.h.b16 %v130
    %v604 = vunpack.c.l.b16 %v131
    %v605 = vunpack.c.h.b16 %v131
    %v606 = vunpack.c.l.b16 %v132
    %v607 = vunpack.c.h.b16 %v132
    %v608 = vunpack.c.l.b16 %v133
    %v609 = vunpack.c.h.b16 %v133
    %v610 = vunpack.c.l.b16 %v134
    %v611 = vunpack.c.h.b16 %v134
    %v612 = vunpack.c.l.b16 %v135
    %v613 = vunpack.c.h.b16 %v135
    %v614 = vunpack.c.l.b16 %v136
    %v615 = vunpack.c.h.b16 %v136
    %v616 = vunpack.c.l.b16 %v137
    %v617 = vunpack.c.h.b16 %v137
    %v618 = vunpack.c.l.b16 %v138
    %v619 = vunpack.c.h.b16 %v138
    %v620 = vunpack.c.l.b16 %v139
    %v621 = vunpack.c.h.b16 %v139
    %v622 = vunpack.c.l.b16 %v140
    %v623 = vunpack.c.h.b16 %v140
    %v624 = vunpack.c.l.b16 %v141
    %v625 = vunpack.c.h.b16 %v141
    %v626 = vunpack.c.l.b16 %v142
    %v627 = vunpack.c.h.b16 %v142
    %v628 = vunpack.c.l.b16 %v143
    %v629 = vunpack.c.h.b16 %v143
    %v630 = vunpack.c.l.b16 %v144
    %v631 = vunpack.c.h.b16 %v144
    %v632 = vunpack.c.l.b16 %v145
    %v633 = vunpack.c.h.b16 %v145
    %v634 = vunpack.c.l.b16 %v146
    %v635 = vunpack.c.h.b16 %v146
    %v636 = vunpack.c.l.b16 %v147
    %v637 = vunpack.c.h.b16 %v147
    %v638 = vunpack.c.l.b16 %v148
    %v639 = vunpack.c.h.b16 %v148
    %v640 = vunpack.c.l.b16 %v149
    %v641 = vunpack.c.h.b16 %v149
    %v642 = vunpack.c.l.b16 %v150
    %v643 = vunpack.c.h.b16 %v150
    %v644 = vunpack.c.l.b16 %v151
    %v645 = vunpack.c.h.b16 %v151
    %v646 = vunpack.c.l.b16 %v152
    %v647 = vunpack.c.h.b16 %v152
    %v648 = vunpack.c.l.b16 %v153
    %v649 = vunpack.c.h.b16 %v153
    %v650 = vunpack.c.l.b16 %v154
    %v651 = vunpack.c.h.b16 %v154
    %v652 = vunpack.c.l.b16 %v155
    %v653 = vunpack.c.h.b16 %v155
    %v654 = vunpack.c.l.b16 %v156
    %v655 = vunpack.c.h.b16 %v156
    %v656 = vunpack.c.l.b16 %v157
    %v657 = vunpack.c.h.b16 %v157
    %v658 = vunpack.c.l.b16 %v158
    %v659 = vunpack.c.h.b16 %v158
    %v660 = vunpack.c.l.b16 %v159
    %v661 = vunpack.c.h.b16 %v159
    %v662 = vunpack.c.l.b16 %v160
    %v663 = vunpack.c.h.b16 %v160
    %v664 = vunpack.c.l.b16 %v161
    %v665 = vunpack.c.h.b16 %v161
    %v666 = vunpack.c.l.b16 %v162
    %v667 = vunpack.c.h.b16 %v162
    %v668 = vunpack.c.l.b16 %v163
    %v669 = vunpack.c.h.b16 %v163
    %v670 = vunpack.c.l.b16 %v164
    %v671 = vunpack.c.h.b16 %v164
    %v672 = vunpack.c.l.b16 %v165
    %v673 = vunpack.c.h.b16 %v165
    %v674 = vunpack.c.l.b16 %v166
    %v675 = vunpack.c.h.b16 %v166
    %v676 = vunpack.c.l.b16 %v167
    %v677 = vunpack.c.h.b16 %v167
    %v678 = vunpack.c.l.b16 %v168
    %v679 = vunpack.c.h.b16 %v168
    %v680 = vunpack.c.l.b16 %v169
    %v681 = vunpack.c.h.b16 %v169
    %v682 = vunpack.c.l.b16 %v170
    %v683 = vunpack.c.h.b16 %v170
    %v684 = vunpack.c.l.b16 %v171
    %v685 = vunpack.c.h.b16 %v171
    %v686 = vunpack.c.l.b16 %v172
    %v687 = vunpack.c.h.b16 %v172
    %v688 = vunpack.c.l.b16 %v173
    %v689 = vunpack.c.h.b16 %v173
    %v690 = vunpack.c.l.b16 %v174
    %v691 = vunpack.c.h.b16 %v174
    %v692 = vunpack.c.l.b16 %v175
    %v693 = vunpack.c.h.b16 %v175
    %v694 = vunpack.c.l.b16 %v176
    %v695 = vunpack.c.h.b16 %v176
    %v696 = vunpack.c.l.b16 %v177
    %v697 = vunpack.c.h.b16 %v177
    %v698 = vunpack.c.l.b16 %v178
    %v699 = vunpack.c.h.b16 %v178
    %v700 = vunpack.c.l.b16 %v179
    %v701 = vunpack.c.h.b16 %v179
    %v702 = vunpack.c.l.b16 %v180
    %v703 = vunpack.c.h.b16 %v180
    %v704 = vunpack.c.l.b16 %v181
    %v705 = vunpack.c.h.b16 %v181
    %v706 = vunpack.c.l.b16 %v182
    %v707 = vunpack.c.h.b16 %v182
    %v708 = vunpack.c.l.b16 %v183
    %v709 = vunpack.c.h.b16 %v183
    %v710 = vunpack.c.l.b16 %v184
    %v711 = vunpack.c.h.b16 %v184
    %v712 = vunpack.c.l.b16 %v185
    %v713 = vunpack.c.h.b16 %v185
    %v714 = vunpack.c.l.b16 %v186
    %v715 = vunpack.c.h.b16 %v186
    %v716 = vunpack.c.l.b16 %v187
    %v717 = vunpack.c.h.b16 %v187
    %v718 = vunpack.c.l.b16 %v188
    %v719 = vunpack.c.h.b16 %v188
    %v720 = vunpack.c.l.b16 %v189
    %v721 = vunpack.c.h.b16 %v189
    %v722 = vunpack.c.l.b16 %v190
    %v723 = vunpack.c.h.b16 %v190
    %v724 = vunpack.c.l.b16 %v191
    %v725 = vunpack.c.h.b16 %v191
    %v726 = vunpack.c.l.b16 %v192
    %v727 = vunpack.c.h.b16 %v192
    %v728 = vunpack.c.l.b16 %v193
    %v729 = vunpack.c.h.b16 %v193
    %v730 = vunpack.c.l.b16 %v194
    %v731 = vunpack.c.h.b16 %v194
    %v732 = vunpack.c.l.b16 %v195
    %v733 = vunpack.c.h.b16 %v195
    %v734 = vunpack.c.l.b16 %v196
    %v735 = vunpack.c.h.b16 %v196
    %v736 = vunpack.c.l.b16 %v197
    %v737 = vunpack.c.h.b16 %v197
    %v738 = vunpack.c.l.b16 %v198
    %v739 = vunpack.c.h.b16 %v198
    %v740 = vunpack.c.l.b16 %v199
    %v741 = vunpack.c.h.b16 %v199
    %v742 = vunpack.c.l.b16 %v200
    %v743 = vunpack.c.h.b16 %v200
    %v744 = vunpack.c.l.b16 %v201
    %v745 = vunpack.c.h.b16 %v201
    %v746 = vunpack.c.l.b16 %v202
    %v747 = vunpack.c.h.b16 %v202
    %v748 = vunpack.c.l.b16 %v203
    %v749 = vunpack.c.h.b16 %v203
    %v750 = vunpack.c.l.b16 %v204
    %v751 = vunpack.c.h.b16 %v204
    %v752 = vunpack.c.l.b16 %v205
    %v753 = vunpack.c.h.b16 %v205
    %v754 = vunpack.c.l.b16 %v206
    %v755 = vunpack.c.h.b16 %v206
    %v756 = vunpack.c.l.b16 %v207
    %v757 = vunpack.c.h.b16 %v207
    %v758 = vunpack.c.l.b16 %v208
    %v759 = vunpack.c.h.b16 %v208
    %v760 = vunpack.c.l.b16 %v209
    %v761 = vunpack.c.h.b16 %v209
    %v762 = vunpack.c.l.b16 %v210
    %v763 = vunpack.c.h.b16 %v210
    %v764 = vunpack.c.l.b16 %v211
    %v765 = vunpack.c.h.b16 %v211
    %v766 = vunpack.c.l.b16 %v212
    %v767 = vunpack.c.h.b16 %v212
    %v768 = vunpack.c.l.b16 %v213
    %v769 = vunpack.c.h.b16 %v213
    %v770 = vunpack.c.l.b16 %v214
    %v771 = vunpack.c.h.b16 %v214
    %v772 = vunpack.c.l.b16 %v215
    %v773 = vunpack.c.h.b16 %v215
    %v774 = vunpack.c.l.b16 %v216
    %v775 = vunpack.c.h.b16 %v216
    %v776 = vunpack.c.l.b16 %v217
    %v777 = vunpack.c.h.b16 %v217
    %v778 = vunpack.c.l.b16 %v218
    %v779 = vunpack.c.h.b16 %v218
    %v780 = vunpack.c.l.b16 %v219
    %v781 = vunpack.c.h.b16 %v219
    %v782 = vunpack.c.l.b16 %v220
    %v783 = vunpack.c.h.b16 %v220
    %v784 = vunpack.c.l.b16 %v221
    %v785 = vunpack.c.h.b16 %v221
    %v786 = vunpack.c.l.b16 %v222
    %v787 = vunpack.c.h.b16 %v222
    %v788 = vunpack.c.l.b16 %v223
    %v789 = vunpack.c.h.b16 %v223
    %v790 = vunpack.c.l.b16 %v224
    %v791 = vunpack.c.h.b16 %v224
    %v792 = vunpack.c.l.b16 %v225
    %v793 = vunpack.c.h.b16 %v225
    %v794 = vunpack.c.l.b16 %v226
    %v795 = vunpack.c.h.b16 %v226
    %v796 = vunpack.c.l.b16 %v227
    %v797 = vunpack.c.h.b16 %v227
    %v798 = vunpack.c.l.b16 %v228
    %v799 = vunpack.c.h.b16 %v228
    %v800 = vunpack.c.l.b16 %v229
    %v801 = vunpack.c.h.b16 %v229
    %v802 = vunpack.c.l.b16 %v230
    %v803 = vunpack.c.h.b16 %v230
    %v804 = vunpack.c.l.b16 %v231
    %v805 = vunpack.c.h.b16 %v231
    %v806 = vunpack.c.l.b16 %v232
    %v807 = vunpack.c.h.b16 %v232
    %v808 = vunpack.c.l.b16 %v233
    %v809 = vunpack.c.h.b16 %v233
    %v810 = vunpack.c.l.b16 %v234
    %v811 = vunpack.c.h.b16 %v234
    %v812 = vunpack.c.l.b16 %v235
    %v813 = vunpack.c.h.b16 %v235
    %v814 = vunpack.c.l.b16 %v236
    %v815 = vunpack.c.h.b16 %v236
    %v816 = vunpack.c.l.b16 %v237
    %v817 = vunpack.c.h.b16 %v237
    %v818 = vunpack.c.l.b16 %v238
    %v819 = vunpack.c.h.b16 %v238
    %v820 = vunpack.c.l.b16 %v239
    %v821 = vunpack.c.h.b16 %v239
    %v822 = vunpack.c.l.b16 %v240
    %v823 = vunpack.c.h.b16 %v240
    %v824 = vunpack.c.l.b16 %v241
    %v825 = vunpack.c.h.b16 %v241
    %v826 = vunpack.c.l.b16 %v242
    %v827 = vunpack.c.h.b16 %v242
    %v828 = vunpack.c.l.b16 %v243
    %v829 = vunpack.c.h.b16 %v243
    %v830 = vunpack.c.l.b16 %v244
    %v831 = vunpack.c.h.b16 %v244
    %v832 = vunpack.c.l.b16 %v245
    %v833 = vunpack.c.h.b16 %v245
    %v834 = vunpack.c.l.b16 %v246
    %v835 = vunpack.c.h.b16 %v246
    %v836 = vunpack.c.l.b16 %v247
    %v837 = vunpack.c.h.b16 %v247
    %v838 = vunpack.c.l.b16 %v248
    %v839 = vunpack.c.h.b16 %v248
    %v840 = vunpack.c.l.b16 %v249
    %v841 = vunpack.c.h.b16 %v249
    %v842 = vunpack.c.l.b16 %v250
    %v843 = vunpack.c.h.b16 %v250
    %v844 = vunpack.c.l.b16 %v251
    %v845 = vunpack.c.h.b16 %v251
    %v846 = vunpack.c.l.b16 %v252
    %v847 = vunpack.c.h.b16 %v252
    %v848 = vunpack.c.l.b16 %v253
    %v849 = vunpack.c.h.b16 %v253
    %v850 = vunpack.c.l.b16 %v254
    %v851 = vunpack.c.h.b16 %v254
    %v852 = vunpack.c.l.b16 %v255
    %v853 = vunpack.c.h.b16 %v255
    %v854 = vunpack.c.l.b16 %v256
    %v855 = vunpack.c.h.b16 %v256
    %v856 = vunpack.c.l.b16 %v257
    %v857 = vunpack.c.h.b16 %v257
    %v858 = vunpack.c.l.b16 %v258
    %v859 = vunpack.c.h.b16 %v258
    %v860 = vunpack.c.l.b16 %v259
    %v861 = vunpack.c.h.b16 %v259
    %v862 = vunpack.c.l.b16 %v260
    %v863 = vunpack.c.h.b16 %v260
    %v864 = vunpack.c.l.b16 %v261
    %v865 = vunpack.c.h.b16 %v261
    %v866 = vunpack.c.l.b16 %v262
    %v867 = vunpack.c.h.b16 %v262
    %v868 = vunpack.c.l.b16 %v263
    %v869 = vunpack.c.h.b16 %v263
    %v870 = vunpack.c.l.b16 %v264
    %v871 = vunpack.c.h.b16 %v264
    %v872 = vunpack.c.l.b16 %v265
    %v873 = vunpack.c.h.b16 %v265
    %v874 = vunpack.c.l.b16 %v266
    %v875 = vunpack.c.h.b16 %v266
    %v876 = vunpack.c.l.b16 %v267
    %v877 = vunpack.c.h.b16 %v267
    %v878 = vunpack.c.l.b16 %v268
    %v879 = vunpack.c.h.b16 %v268
    %v880 = vunpack.c.l.b16 %v269
    %v881 = vunpack.c.h.b16 %v269
    %v882 = vunpack.c.l.b16 %v270
    %v883 = vunpack.c.h.b16 %v270
    %v884 = vunpack.c.l.b16 %v271
    %v885 = vunpack.c.h.b16 %v271
    %v886 = vunpack.c.l.b16 %v272
    %v887 = vunpack.c.h.b16 %v272
    %v888 = vunpack.c.l.b16 %v273
    %v889 = vunpack.c.h.b16 %v273
    %v890 = vunpack.c.l.b16 %v274
    %v891 = vunpack.c.h.b16 %v274
    %v892 = vunpack.c.l.b16 %v275
    %v893 = vunpack.c.h.b16 %v275
    %v894 = vunpack.c.l.b16 %v276
    %v895 = vunpack.c.h.b16 %v276
    %v896 = vunpack.c.l.b16 %v277
    %v897 = vunpack.c.h.b16 %v277
    %v898 = vunpack.c.l.b16 %v278
    %v899 = vunpack.c.h.b16 %v278
    %v900 = vunpack.c.l.b16 %v279
    %v901 = vunpack.c.h.b16 %v279
    %v902 = vunpack.c.l.b16 %v280
    %v903 = vunpack.c.h.b16 %v280
    %v904 = vunpack.c.l.b16 %v281
    %v905 = vunpack.c.h.b16 %v281
    %v906 = vunpack.c.l.b16 %v282
    %v907 = vunpack.c.h.b16 %v282
    %v908 = vunpack.c.l.b16 %v283
    %v909 = vunpack.c.h.b16 %v283
    %v910 = vunpack.c.l.b16 %v284
    %v911 = vunpack.c.h.b16 %v284
    %v912 = vunpack.c.l.b16 %v285
    %v913 = vunpack.c.h.b16 %v285
    %v914 = vunpack.c.l.b16 %v286
    %v915 = vunpack.c.h.b16 %v286
    %v916 = vunpack.c.l.b16 %v287
    %v917 = vunpack.c.h.b16 %v287
    %v918 = vunpack.c.l.b16 %v288
    %v919 = vunpack.c.h.b16 %v288
    %v920 = vunpack.c.l.b16 %v289
    %v921 = vunpack.c.h.b16 %v289
    %v922 = vunpack.c.l.b16 %v290
    %v923 = vunpack.c.h.b16 %v290
    %v924 = vunpack.c.l.b16 %v291
    %v925 = vunpack.c.h.b16 %v291
    %v926 = vpack.c.b16 %v538, %v534
    %v927 = vpack.c.b16 %v539, %v535
    %v928 = vpack.c.b16 %v540, %v536
    %v929 = vpack.c.b16 %v541, %v537
    %v930 = vpack.c.b16 %v546, %v542
    %v931 = vpack.c.b16 %v547, %v543
    %v932 = vpack.c.b16 %v548, %v544
    %v933 = vpack.c.b16 %v549, %v545
    %v934 = vpack.c.b16 %v554, %v550
    %v935 = vpack.c.b16 %v555, %v551
    %v936 = vpack.c.b16 %v556, %v552
    %v937 = vpack.c.b16 %v557, %v553
    %v938 = vpack.c.b16 %v562, %v558
    %v939 = vpack.c.b16 %v563, %v559
    %v940 = vpack.c.b16 %v564, %v560
    %v941 = vpack.c.b16 %v565, %v561
    %v942 = vpack.c.b16 %v570, %v566
    %v943 = vpack.c.b16 %v571, %v567
    %v944 = vpack.c.b16 %v572, %v568
    %v945 = vpack.c.b16 %v573, %v569
    %v946 = vpack.c.b16 %v578, %v574
    %v947 = vpack.c.b16 %v579, %v575
    %v948 = vpack.c.b16 %v580, %v576
    %v949 = vpack.c.b16 %v581, %v577
    %v950 = vpack.c.b16 %v586, %v582
    %v951 = vpack.c.b16 %v587, %v583
    %v952 = vpack.c.b16 %v588, %v584
    %v953 = vpack.c.b16 %v589, %v585
    %v954 = vpack.c.b16 %v594, %v590
    %v955 = vpack.c.b16 %v595, %v591
    %v956 = vpack.c.b16 %v596, %v592
    %v957 = vpack.c.b16 %v597, %v593
    %v958 = vpack.c.b16 %v602, %v598
    %v959 = vpack.c.b16 %v603, %v599
    %v960 = vpack.c.b16 %v604, %v600
    %v961 = vpack.c.b16 %v605, %v601
    %v962 = vpack.c.b16 %v610, %v606
    %v963 = vpack.c.b16 %v611, %v607
    %v964 = vpack.c.b16 %v612, %v608
    %v965 = vpack.c.b16 %v613, %v609
    %v966 = vpack.c.b16 %v618, %v614
    %v967 = vpack.c.b16 %v619, %v615
    %v968 = vpack.c.b16 %v620, %v616
    %v969 = vpack.c.b16 %v621, %v617
    %v970 = vpack.c.b16 %v626, %v622
    %v971 = vpack.c.b16 %v627, %v623
    %v972 = vpack.c.b16 %v628, %v624
    %v973 = vpack.c.b16 %v629, %v625
    %v974 = vpack.c.b16 %v634, %v630
    %v975 = vpack.c.b16 %v635, %v631
    %v976 = vpack.c.b16 %v636, %v632
    %v977 = vpack.c.b16 %v637, %v633
    %v978 = vpack.c.b16 %v642, %v638
    %v979 = vpack.c.b16 %v643, %v639
    %v980 = vpack.c.b16 %v644, %v640
    %v981 = vpack.c.b16 %v645, %v641
    %v982 = vpack.c.b16 %v650, %v646
    %v983 = vpack.c.b16 %v651, %v647
    %v984 = vpack.c.b16 %v652, %v648
    %v985 = vpack.c.b16 %v653, %v649
    %v986 = vpack.c.b16 %v658, %v654
    %v987 = vpack.c.b16 %v659, %v655
    %v988 = vpack.c.b16 %v660, %v656
    %v989 = vpack.c.b16 %v661, %v657
    %v990 = vpack.c.b16 %v666, %v662
    %v991 = vpack.c.b16 %v667, %v663
    %v992 = vpack.c.b16 %v668, %v664
    %v993 = vpack.c.b16 %v669, %v665
    %v994 = vpack.c.b16 %v674, %v670
    %v995 = vpack.c.b16 %v675, %v671
    %v996 = vpack.c.b16 %v676, %v672
    %v997 = vpack.c.b16 %v677, %v673
    %v998 = vpack.c.b16 %v682, %v678
    %v999 = vpack.c.b16 %v683, %v679
    %v1000 = vpack.c.b16 %v684, %v680
    %v1001 = vpack.c.b16 %v685, %v681
    %v1002 = vpack.c.b16 %v690, %v686
    %v1003 = vpack.c.b16 %v691, %v687
    %v1004 = vpack.c.b16 %v692, %v688
    %v1005 = vpack.c.b16 %v693, %v689
    %v1006 = vpack.c.b16 %v698, %v694
    %v1007 = vpack.c.b16 %v699, %v695
    %v1008 = vpack.c.b16 %v700, %v696
    %v1009 = vpack.c.b16 %v701, %v697
    %v1010 = vpack.c.b16 %v706, %v702
    %v1011 = vpack.c.b16 %v707, %v703
    %v1012 = vpack.c.b16 %v708, %v704
    %v1013 = vpack.c.b16 %v709, %v705
    %v1014 = vpack.c.b16 %v714, %v710
    %v1015 = vpack.c.b16 %v715, %v711
    %v1016 = vpack.c.b16 %v716, %v712
    %v1017 = vpack.c.b16 %v717, %v713
    %v1018 = vpack.c.b16 %v722, %v718
    %v1019 = vpack.c.b16 %v723, %v719
    %v1020 = vpack.c.b16 %v724, %v720
    %v1021 = vpack.c.b16 %v725, %v721
    %v1022 = vpack.c.b16 %v730, %v726
    %v1023 = vpack.c.b16 %v731, %v727
    %v1024 = vpack.c.b16 %v732, %v728
    %v1025 = vpack.c.b16 %v733, %v729
    %v1026 = vpack.c.b16 %v738, %v734
    %v1027 = vpack.c.b16 %v739, %v735
    %v1028 = vpack.c.b16 %v740, %v736
    %v1029 = vpack.c.b16 %v741, %v737
    %v1030 = vpack.c.b16 %v746, %v742
    %v1031 = vpack.c.b16 %v747, %v743
    %v1032 = vpack.c.b16 %v748, %v744
    %v1033 = vpack.c.b16 %v749, %v745
    %v1034 = vpack.c.b16 %v754, %v750
    %v1035 = vpack.c.b16 %v755, %v751
    %v1036 = vpack.c.b16 %v756, %v752
    %v1037 = vpack.c.b16 %v757, %v753
    %v1038 = vpack.c.b16 %v762, %v758
    %v1039 = vpack.c.b16 %v763, %v759
    %v1040 = vpack.c.b16 %v764, %v760
    %v1041 = vpack.c.b16 %v765, %v761
    %v1042 = vpack.c.b16 %v770, %v766
    %v1043 = vpack.c.b16 %v771, %v767
    %v1044 = vpack.c.b16 %v772, %v768
    %v1045 = vpack.c.b16 %v773, %v769
    %v1046 = vpack.c.b16 %v778, %v774
    %v1047 = vpack.c.b16 %v779, %v775
    %v1048 = vpack.c.b16 %v780, %v776
    %v1049 = vpack.c.b16 %v781, %v777
    %v1050 = vpack.c.b16 %v786, %v782
    %v1051 = vpack.c.b16 %v787, %v783
    %v1052 = vpack.c.b16 %v788, %v784
    %v1053 = vpack.c.b16 %v789, %v785
    %v1054 = vpack.c.b16 %v794, %v790
    %v1055 = vpack.c.b16 %v795, %v791
    %v1056 = vpack.c.b16 %v796, %v792
    %v1057 = vpack.c.b16 %v797, %v793
    %v1058 = vpack.c.b16 %v802, %v798
    %v1059 = vpack.c.b16 %v803, %v799
    %v1060 = vpack.c.b16 %v804, %v800
    %v1061 = vpack.c.b16 %v805, %v801
    %v1062 = vpack.c.b16 %v810, %v806
    %v1063 = vpack.c.b16 %v811, %v807
    %v1064 = vpack.c.b16 %v812, %v808
    %v1065 = vpack.c.b16 %v813, %v809
    %v1066 = vpack.c.b16 %v818, %v814
    %v1067 = vpack.c.b16 %v819, %v815
    %v1068 = vpack.c.b16 %v820, %v816
    %v1069 = vpack.c.b16 %v821, %v817
    %v1070 = vpack.c.b16 %v826, %v822
    %v1071 = vpack.c.b16 %v827, %v823
    %v1072 = vpack.c.b16 %v828, %v824
    %v1073 = vpack.c.b16 %v829, %v825
    %v1074 = vpack.c.b16 %v834, %v830
    %v1075 = vpack.c.b16 %v835, %v831
    %v1076 = vpack.c.b16 %v836, %v832
    %v1077 = vpack.c.b16 %v837, %v833
    %v1078 = vpack.c.b16 %v842, %v838
    %v1079 = vpack.c.b16 %v843, %v839
    %v1080 = vpack.c.b16 %v844, %v840
    %v1081 = vpack.c.b16 %v845, %v841
    %v1082 = vpack.c.b16 %v850, %v846
    %v1083 = vpack.c.b16 %v851, %v847
    %v1084 = vpack.c.b16 %v852, %v848
    %v1085 = vpack.c.b16 %v853, %v849
    %v1086 = vpack.c.b16 %v858, %v854
    %v1087 = vpack.c.b16 %v859, %v855
    %v1088 = vpack.c.b16 %v860, %v856
    %v1089 = vpack.c.b16 %v861, %v857
    %v1090 = vpack.c.b16 %v866, %v862
    %v1091 = vpack.c.b16 %v867, %v863
    %v1092 = vpack.c.b16 %v868, %v864
    %v1093 = vpack.c.b16 %v869, %v865
    %v1094 = vpack.c.b16 %v874, %v870
    %v1095 = vpack.c.b16 %v875, %v871
    %v1096 = vpack.c.b16 %v876, %v872
    %v1097 = vpack.c.b16 %v877, %v873
    %v1098 = vpack.c.b16 %v882, %v878
    %v1099 = vpack.c.b16 %v883, %v879
    %v1100 = vpack.c.b16 %v884, %v880
    %v1101 = vpack.c.b16 %v885, %v881
    %v1102 = vpack.c.b16 %v890, %v886
    %v1103 = vpack.c.b16 %v891, %v887
    %v1104 = vpack.c.b16 %v892, %v888
    %v1105 = vpack.c.b16 %v893, %v889
    %v1106 = vpack.c.b16 %v898, %v894
    %v1107 = vpack.c.b16 %v899, %v895
    %v1108 = vpack.c.b16 %v900, %v896
    %v1109 = vpack.c.b16 %v901, %v897
    %v1110 = vpack.c.b16 %v906, %v902
    %v1111 = vpack.c.b16 %v907, %v903
    %v1112 = vpack.c.b16 %v908, %v904
    %v1113 = vpack.c.b16 %v909, %v905
    %v1114 = vpack.c.b16 %v914, %v910
    %v1115 = vpack.c.b16 %v915, %v911
    %v1116 = vpack.c.b16 %v916, %v912
    %v1117 = vpack.c.b16 %v917, %v913
    %v1118 = vpack.c.b16 %v922, %v918
    %v1119 = vpack.c.b16 %v923, %v919
    %v1120 = vpack.c.b16 %v924, %v920
    %v1121 = vpack.c.b16 %v925, %v921
    %vm1318 = vcmask 130048
    %v1320 = vsel %vm1318, %v331, 0
    %1322 = vmatprep.subr.bf16.mxu0 %v955
    %1323 = vmatpush1.bf16.msra.mxu0 %v954
    %1324 = vmatprep.subr.bf16.mxu0 %v951
    %1325 = vmatpush1.bf16.msra.mxu0 %v950
    %1326 = vmatprep.subr.bf16.mxu0 %v947
    %1327 = vmatpush1.bf16.msra.mxu0 %v946
    %1328 = vmatprep.subr.bf16.mxu0 %v943
    %1329 = vmatpush1.bf16.msra.mxu0 %v942
    %1330 = vmatprep.subr.bf16.mxu0 %v939
    %1331 = vmatpush1.bf16.msra.mxu0 %v938
    %1332 = vmatprep.subr.bf16.mxu0 %v935
    %1333 = vmatpush1.bf16.msra.mxu0 %v934
    %1334 = vmatprep.subr.bf16.mxu0 %v931
    %1335 = vmatpush1.bf16.msra.mxu0 %v930
    %1336 = vmatprep.subr.bf16.mxu0 %v927
    %1337 = vmatpush1.bf16.msra.mxu0 %v926
    %1338 = vmatprep.subr.bf16.mxu0 %v987
    %1339 = vmatpush2.bf16.msra.mxu0 %v986
    %1340 = vmatprep.subr.bf16.mxu0 %v983
    %1341 = vmatpush2.bf16.msra.mxu0 %v982
    %1342 = vmatprep.subr.bf16.mxu0 %v979
    %1343 = vmatpush2.bf16.msra.mxu0 %v978
    %1344 = vmatprep.subr.bf16.mxu0 %v975
    %1345 = vmatpush2.bf16.msra.mxu0 %v974
    %1346 = vmatprep.subr.bf16.mxu0 %v971
    %1347 = vmatpush2.bf16.msra.mxu0 %v970
    %1348 = vmatprep.subr.bf16.mxu0 %v967
    %1349 = vmatpush2.bf16.msra.mxu0 %v966
    %1350 = vmatprep.subr.bf16.mxu0 %v963
    %1351 = vmatpush2.bf16.msra.mxu0 %v962
    %1352 = vmatprep.subr.bf16.mxu0 %v959
    %1353 = vmatpush2.bf16.msra.mxu0 %v958
    %1354 = vmatprep.mubr.bf16.mxu0 %v326
    %1355 = vmatmul.mubr.bf16.gmra.mxu0 %v325
    %v1356 = vpop.f32.mrf.mxu0
    %v1357 = vadd.f32 %v297, %v1356
    %v1358 = vpop.f32.mrf.mxu0
    %v1359 = vadd.f32 %v301, %v1358
    %v1360 = vpop.f32.mrf.mxu0
    %v1361 = vpop.f32.mrf.mxu0
    %1362 = vdwg.mxu0
    %1363 = vmatprep.subr.bf16.mxu0 %v1019
    %1364 = vmatpush1.bf16.msra.mxu0 %v1018
    %1365 = vmatprep.subr.bf16.mxu0 %v1015
    %1366 = vmatpush1.bf16.msra.mxu0 %v1014
    %1367 = vmatprep.subr.bf16.mxu0 %v1011
    %1368 = vmatpush1.bf16.msra.mxu0 %v1010
    %1369 = vmatprep.subr.bf16.mxu0 %v1007
    %1370 = vmatpush1.bf16.msra.mxu0 %v1006
    %1371 = vmatprep.subr.bf16.mxu0 %v1003
    %1372 = vmatpush1.bf16.msra.mxu0 %v1002
    %1373 = vmatprep.subr.bf16.mxu0 %v999
    %1374 = vmatpush1.bf16.msra.mxu0 %v998
    %1375 = vmatprep.subr.bf16.mxu0 %v995
    %1376 = vmatpush1.bf16.msra.mxu0 %v994
    %1377 = vmatprep.subr.bf16.mxu0 %v991
    %1378 = vmatpush1.bf16.msra.mxu0 %v990
    %1379 = vmatprep.subr.bf16.mxu0 %v1051
    %1380 = vmatpush2.bf16.msra.mxu0 %v1050
    %1381 = vmatprep.subr.bf16.mxu0 %v1047
    %1382 = vmatpush2.bf16.msra.mxu0 %v1046
    %1383 = vmatprep.subr.bf16.mxu0 %v1043
    %1384 = vmatpush2.bf16.msra.mxu0 %v1042
    %1385 = vmatprep.subr.bf16.mxu0 %v1039
    %1386 = vmatpush2.bf16.msra.mxu0 %v1038
    %1387 = vmatprep.subr.bf16.mxu0 %v1035
    %1388 = vmatpush2.bf16.msra.mxu0 %v1034
    %1389 = vmatprep.subr.bf16.mxu0 %v1031
    %1390 = vmatpush2.bf16.msra.mxu0 %v1030
    %1391 = vmatprep.subr.bf16.mxu0 %v1027
    %1392 = vmatpush2.bf16.msra.mxu0 %v1026
    %1393 = vmatprep.subr.bf16.mxu0 %v1023
    %1394 = vmatpush2.bf16.msra.mxu0 %v1022
    %1395 = vmatprep.mubr.bf16.mxu0 %v328
    %1396 = vmatmul.mubr.bf16.gmra.mxu0 %v327
    %v1397 = vpop.f32.mrf.mxu0
    %v1398 = vadd.f32 %v1357, %v1397
    %v1399 = vpop.f32.mrf.mxu0
    %v1400 = vadd.f32 %v1359, %v1399
    %v1401 = vpop.f32.mrf.mxu0
    %v1402 = vpop.f32.mrf.mxu0
    %1403 = vdwg.mxu0
    %1404 = vmatprep.subr.bf16.mxu0 %v1083
    %1405 = vmatpush1.bf16.msra.mxu0 %v1082
    %1406 = vmatprep.subr.bf16.mxu0 %v1079
    %1407 = vmatpush1.bf16.msra.mxu0 %v1078
    %1408 = vmatprep.subr.bf16.mxu0 %v1075
    %1409 = vmatpush1.bf16.msra.mxu0 %v1074
    %1410 = vmatprep.subr.bf16.mxu0 %v1071
    %1411 = vmatpush1.bf16.msra.mxu0 %v1070
    %1412 = vmatprep.subr.bf16.mxu0 %v1067
    %1413 = vmatpush1.bf16.msra.mxu0 %v1066
    %1414 = vmatprep.subr.bf16.mxu0 %v1063
    %1415 = vmatpush1.bf16.msra.mxu0 %v1062
    %1416 = vmatprep.subr.bf16.mxu0 %v1059
    %1417 = vmatpush1.bf16.msra.mxu0 %v1058
    %1418 = vmatprep.subr.bf16.mxu0 %v1055
    %1419 = vmatpush1.bf16.msra.mxu0 %v1054
    %1420 = vmatprep.subr.bf16.mxu0 %v1115
    %1421 = vmatpush2.bf16.msra.mxu0 %v1114
    %1422 = vmatprep.subr.bf16.mxu0 %v1111
    %1423 = vmatpush2.bf16.msra.mxu0 %v1110
    %1424 = vmatprep.subr.bf16.mxu0 %v1107
    %1425 = vmatpush2.bf16.msra.mxu0 %v1106
    %1426 = vmatprep.subr.bf16.mxu0 %v1103
    %1427 = vmatpush2.bf16.msra.mxu0 %v1102
    %1428 = vmatprep.subr.bf16.mxu0 %v1099
    %1429 = vmatpush2.bf16.msra.mxu0 %v1098
    %1430 = vmatprep.subr.bf16.mxu0 %v1095
    %1431 = vmatpush2.bf16.msra.mxu0 %v1094
    %1432 = vmatprep.subr.bf16.mxu0 %v1091
    %1433 = vmatpush2.bf16.msra.mxu0 %v1090
    %1434 = vmatprep.subr.bf16.mxu0 %v1087
    %1435 = vmatpush2.bf16.msra.mxu0 %v1086
    %1436 = vmatprep.mubr.bf16.mxu0 %v330
    %1437 = vmatmul.mubr.bf16.gmra.mxu0 %v329
    %v1438 = vpop.f32.mrf.mxu0
    %v1439 = vadd.f32 %v1398, %v1438
    %v1440 = vpop.f32.mrf.mxu0
    %v1441 = vadd.f32 %v1400, %v1440
    %v1442 = vpop.f32.mrf.mxu0
    %v1443 = vpop.f32.mrf.mxu0
    %1444 = vdwg.mxu0
    %1445 = vmatprep.subr.bf16.mxu0 0
    %1446 = vmatpush1.bf16.msra.mxu0 0
    %1447 = vmatprep.subr.bf16.mxu0 0
    %1448 = vmatpush1.bf16.msra.mxu0 0
    %1449 = vmatprep.subr.bf16.mxu0 0
    %1450 = vmatpush1.bf16.msra.mxu0 0
    %1451 = vmatprep.subr.bf16.mxu0 0
    %1452 = vmatpush1.bf16.msra.mxu0 0
    %1453 = vmatprep.subr.bf16.mxu0 0
    %1454 = vmatpush1.bf16.msra.mxu0 0
    %1455 = vmatprep.subr.bf16.mxu0 0
    %1456 = vmatpush1.bf16.msra.mxu0 0
    %1457 = vmatprep.subr.bf16.mxu0 0
    %1458 = vmatpush1.bf16.msra.mxu0 0
    %1459 = vmatprep.subr.bf16.mxu0 %v1119
    %1460 = vmatpush1.bf16.msra.mxu0 %v1118
    %1461 = vmatprep.subr.bf16.mxu0 0
    %1462 = vmatpush2.bf16.msra.mxu0 0
    %1463 = vmatprep.subr.bf16.mxu0 0
    %1464 = vmatpush2.bf16.msra.mxu0 0
    %1465 = vmatprep.subr.bf16.mxu0 0
    %1466 = vmatpush2.bf16.msra.mxu0 0
    %1467 = vmatprep.subr.bf16.mxu0 0
    %1468 = vmatpush2.bf16.msra.mxu0 0
    %1469 = vmatprep.subr.bf16.mxu0 0
    %1470 = vmatpush2.bf16.msra.mxu0 0
    %1471 = vmatprep.subr.bf16.mxu0 0
    %1472 = vmatpush2.bf16.msra.mxu0 0
    %1473 = vmatprep.subr.bf16.mxu0 0
    %1474 = vmatpush2.bf16.msra.mxu0 0
    %1475 = vmatprep.subr.bf16.mxu0 0
    %1476 = vmatpush2.bf16.msra.mxu0 0
    %1477 = vmatprep.mubr.bf16.mxu0 0
    %1478 = vmatmul.mubr.bf16.gmra.mxu0 %v1320
    %v1479 = vpop.f32.mrf.mxu0
    %v1480 = vadd.f32 %v1439, %v1479
    %v1481 = vpop.f32.mrf.mxu0
    %v1482 = vadd.f32 %v1441, %v1481
    %v1483 = vpop.f32.mrf.mxu0
    %v1484 = vpop.f32.mrf.mxu0
    %1485 = vdwg.mxu0
    %1486 = vmatprep.subr.bf16.mxu0 %v957
    %1487 = vmatpush1.bf16.msra.mxu0 %v956
    %1488 = vmatprep.subr.bf16.mxu0 %v953
    %1489 = vmatpush1.bf16.msra.mxu0 %v952
    %1490 = vmatprep.subr.bf16.mxu0 %v949
    %1491 = vmatpush1.bf16.msra.mxu0 %v948
    %1492 = vmatprep.subr.bf16.mxu0 %v945
    %1493 = vmatpush1.bf16.msra.mxu0 %v944
    %1494 = vmatprep.subr.bf16.mxu0 %v941
    %1495 = vmatpush1.bf16.msra.mxu0 %v940
    %1496 = vmatprep.subr.bf16.mxu0 %v937
    %1497 = vmatpush1.bf16.msra.mxu0 %v936
    %1498 = vmatprep.subr.bf16.mxu0 %v933
    %1499 = vmatpush1.bf16.msra.mxu0 %v932
    %1500 = vmatprep.subr.bf16.mxu0 %v929
    %1501 = vmatpush1.bf16.msra.mxu0 %v928
    %1502 = vmatprep.subr.bf16.mxu0 %v989
    %1503 = vmatpush2.bf16.msra.mxu0 %v988
    %1504 = vmatprep.subr.bf16.mxu0 %v985
    %1505 = vmatpush2.bf16.msra.mxu0 %v984
    %1506 = vmatprep.subr.bf16.mxu0 %v981
    %1507 = vmatpush2.bf16.msra.mxu0 %v980
    %1508 = vmatprep.subr.bf16.mxu0 %v977
    %1509 = vmatpush2.bf16.msra.mxu0 %v976
    %1510 = vmatprep.subr.bf16.mxu0 %v973
    %1511 = vmatpush2.bf16.msra.mxu0 %v972
    %1512 = vmatprep.subr.bf16.mxu0 %v969
    %1513 = vmatpush2.bf16.msra.mxu0 %v968
    %1514 = vmatprep.subr.bf16.mxu0 %v965
    %1515 = vmatpush2.bf16.msra.mxu0 %v964
    %1516 = vmatprep.subr.bf16.mxu0 %v961
    %1517 = vmatpush2.bf16.msra.mxu0 %v960
    %1518 = vmatprep.mubr.bf16.mxu0 %v326
    %1519 = vmatmul.mubr.bf16.gmra.mxu0 %v325
    %v1520 = vpop.f32.mrf.mxu0
    %v1521 = vadd.f32 %v305, %v1520
    %v1522 = vpop.f32.mrf.mxu0
    %v1523 = vadd.f32 %v309, %v1522
    %v1524 = vpop.f32.mrf.mxu0
    %v1525 = vpop.f32.mrf.mxu0
    %1526 = vdwg.mxu0
    %1527 = vmatprep.subr.bf16.mxu0 %v1021
    %1528 = vmatpush1.bf16.msra.mxu0 %v1020
    %1529 = vmatprep.subr.bf16.mxu0 %v1017
    %1530 = vmatpush1.bf16.msra.mxu0 %v1016
    %1531 = vmatprep.subr.bf16.mxu0 %v1013
    %1532 = vmatpush1.bf16.msra.mxu0 %v1012
    %1533 = vmatprep.subr.bf16.mxu0 %v1009
    %1534 = vmatpush1.bf16.msra.mxu0 %v1008
    %1535 = vmatprep.subr.bf16.mxu0 %v1005
    %1536 = vmatpush1.bf16.msra.mxu0 %v1004
    %1537 = vmatprep.subr.bf16.mxu0 %v1001
    %1538 = vmatpush1.bf16.msra.mxu0 %v1000
    %1539 = vmatprep.subr.bf16.mxu0 %v997
    %1540 = vmatpush1.bf16.msra.mxu0 %v996
    %1541 = vmatprep.subr.bf16.mxu0 %v993
    %1542 = vmatpush1.bf16.msra.mxu0 %v992
    %1543 = vmatprep.subr.bf16.mxu0 %v1053
    %1544 = vmatpush2.bf16.msra.mxu0 %v1052
    %1545 = vmatprep.subr.bf16.mxu0 %v1049
    %1546 = vmatpush2.bf16.msra.mxu0 %v1048
    %1547 = vmatprep.subr.bf16.mxu0 %v1045
    %1548 = vmatpush2.bf16.msra.mxu0 %v1044
    %1549 = vmatprep.subr.bf16.mxu0 %v1041
    %1550 = vmatpush2.bf16.msra.mxu0 %v1040
    %1551 = vmatprep.subr.bf16.mxu0 %v1037
    %1552 = vmatpush2.bf16.msra.mxu0 %v1036
    %1553 = vmatprep.subr.bf16.mxu0 %v1033
    %1554 = vmatpush2.bf16.msra.mxu0 %v1032
    %1555 = vmatprep.subr.bf16.mxu0 %v1029
    %1556 = vmatpush2.bf16.msra.mxu0 %v1028
    %1557 = vmatprep.subr.bf16.mxu0 %v1025
    %1558 = vmatpush2.bf16.msra.mxu0 %v1024
    %1559 = vmatprep.mubr.bf16.mxu0 %v328
    %1560 = vmatmul.mubr.bf16.gmra.mxu0 %v327
    %v1561 = vpop.f32.mrf.mxu0
    %v1562 = vadd.f32 %v1521, %v1561
    %v1563 = vpop.f32.mrf.mxu0
    %v1564 = vadd.f32 %v1523, %v1563
    %v1565 = vpop.f32.mrf.mxu0
    %v1566 = vpop.f32.mrf.mxu0
    %1567 = vdwg.mxu0
    %1568 = vmatprep.subr.bf16.mxu0 %v1085
    %1569 = vmatpush1.bf16.msra.mxu0 %v1084
    %1570 = vmatprep.subr.bf16.mxu0 %v1081
    %1571 = vmatpush1.bf16.msra.mxu0 %v1080
    %1572 = vmatprep.subr.bf16.mxu0 %v1077
    %1573 = vmatpush1.bf16.msra.mxu0 %v1076
    %1574 = vmatprep.subr.bf16.mxu0 %v1073
    %1575 = vmatpush1.bf16.msra.mxu0 %v1072
    %1576 = vmatprep.subr.bf16.mxu0 %v1069
    %1577 = vmatpush1.bf16.msra.mxu0 %v1068
    %1578 = vmatprep.subr.bf16.mxu0 %v1065
    %1579 = vmatpush1.bf16.msra.mxu0 %v1064
    %1580 = vmatprep.subr.bf16.mxu0 %v1061
    %1581 = vmatpush1.bf16.msra.mxu0 %v1060
    %1582 = vmatprep.subr.bf16.mxu0 %v1057
    %1583 = vmatpush1.bf16.msra.mxu0 %v1056
    %1584 = vmatprep.subr.bf16.mxu0 %v1117
    %1585 = vmatpush2.bf16.msra.mxu0 %v1116
    %1586 = vmatprep.subr.bf16.mxu0 %v1113
    %1587 = vmatpush2.bf16.msra.mxu0 %v1112
    %1588 = vmatprep.subr.bf16.mxu0 %v1109
    %1589 = vmatpush2.bf16.msra.mxu0 %v1108
    %1590 = vmatprep.subr.bf16.mxu0 %v1105
    %1591 = vmatpush2.bf16.msra.mxu0 %v1104
    %1592 = vmatprep.subr.bf16.mxu0 %v1101
    %1593 = vmatpush2.bf16.msra.mxu0 %v1100
    %1594 = vmatprep.subr.bf16.mxu0 %v1097
    %1595 = vmatpush2.bf16.msra.mxu0 %v1096
    %1596 = vmatprep.subr.bf16.mxu0 %v1093
    %1597 = vmatpush2.bf16.msra.mxu0 %v1092
    %1598 = vmatprep.subr.bf16.mxu0 %v1089
    %1599 = vmatpush2.bf16.msra.mxu0 %v1088
    %1600 = vmatprep.mubr.bf16.mxu0 %v330
    %1601 = vmatmul.mubr.bf16.gmra.mxu0 %v329
    %v1602 = vpop.f32.mrf.mxu0
    %v1603 = vadd.f32 %v1562, %v1602
    %v1604 = vpop.f32.mrf.mxu0
    %v1605 = vadd.f32 %v1564, %v1604
    %v1606 = vpop.f32.mrf.mxu0
    %v1607 = vpop.f32.mrf.mxu0
    %1608 = vdwg.mxu0
    %1609 = vmatprep.subr.bf16.mxu0 0
    %1610 = vmatpush1.bf16.msra.mxu0 0
    %1611 = vmatprep.subr.bf16.mxu0 0
    %1612 = vmatpush1.bf16.msra.mxu0 0
    %1613 = vmatprep.subr.bf16.mxu0 0
    %1614 = vmatpush1.bf16.msra.mxu0 0
    %1615 = vmatprep.subr.bf16.mxu0 0
    %1616 = vmatpush1.bf16.msra.mxu0 0
    %1617 = vmatprep.subr.bf16.mxu0 0
    %1618 = vmatpush1.bf16.msra.mxu0 0
    %1619 = vmatprep.subr.bf16.mxu0 0
    %1620 = vmatpush1.bf16.msra.mxu0 0
    %1621 = vmatprep.subr.bf16.mxu0 0
    %1622 = vmatpush1.bf16.msra.mxu0 0
    %1623 = vmatprep.subr.bf16.mxu0 %v1121
    %1624 = vmatpush1.bf16.msra.mxu0 %v1120
    %1625 = vmatprep.subr.bf16.mxu0 0
    %1626 = vmatpush2.bf16.msra.mxu0 0
    %1627 = vmatprep.subr.bf16.mxu0 0
    %1628 = vmatpush2.bf16.msra.mxu0 0
    %1629 = vmatprep.subr.bf16.mxu0 0
    %1630 = vmatpush2.bf16.msra.mxu0 0
    %1631 = vmatprep.subr.bf16.mxu0 0
    %1632 = vmatpush2.bf16.msra.mxu0 0
    %1633 = vmatprep.subr.bf16.mxu0 0
    %1634 = vmatpush2.bf16.msra.mxu0 0
    %1635 = vmatprep.subr.bf16.mxu0 0
    %1636 = vmatpush2.bf16.msra.mxu0 0
    %1637 = vmatprep.subr.bf16.mxu0 0
    %1638 = vmatpush2.bf16.msra.mxu0 0
    %1639 = vmatprep.subr.bf16.mxu0 0
    %1640 = vmatpush2.bf16.msra.mxu0 0
    %1641 = vmatprep.mubr.bf16.mxu0 0
    %1642 = vmatmul.mubr.bf16.gmra.mxu0 %v1320
    %v1643 = vpop.f32.mrf.mxu0
    %v1644 = vadd.f32 %v1603, %v1643
    %v1645 = vpop.f32.mrf.mxu0
    %v1646 = vadd.f32 %v1605, %v1645
    %v1647 = vpop.f32.mrf.mxu0
    %v1648 = vpop.f32.mrf.mxu0
    %1649 = vdwg.mxu0
    %vm1650 = vcmp.gt.f32.partialorder %v1480, 0.0
    %vm1651 = vcmp.gt.f32.partialorder %v1482, 0.0
    %vm1652 = vcmp.gt.f32.partialorder %v1644, 0.0
    %vm1653 = vcmp.gt.f32.partialorder %v1646, 0.0
    %v1654 = vmul.f32 %v1480, 0.2
    %v1655 = vmul.f32 %v1482, 0.2
    %v1656 = vmul.f32 %v1644, 0.2
    %v1657 = vmul.f32 %v1646, 0.2
    %v1658 = vsel %vm1650, %v1480, %v1654
    %v1659 = vsel %vm1651, %v1482, %v1655
    %v1660 = vsel %vm1652, %v1644, %v1656
    %v1661 = vsel %vm1653, %v1646, %v1657
    %v1662 = vpack.c.bf16 %v1658, %v1658
    %v1663 = vpack.c.bf16 %v1659, %v1659
    %v1664 = vpack.c.bf16 %v1660, %v1660
    %v1665 = vpack.c.bf16 %v1661, %v1661
    %v1666 = vld [vmem:[#allocation8] sm:$0xff]
    %v1667 = vld [vmem:[#allocation8 + $0x8] sm:$0xff]
    %v1668 = vld [vmem:[#allocation8 + $0x10] sm:$0xff]
    %v1669 = vld [vmem:[#allocation8 + $0x18] sm:$0xff]
    %v1670 = vld [vmem:[#allocation8 + $0x20] sm:$0xff]
    %v1671 = vld [vmem:[#allocation8 + $0x28] sm:$0xff]
    %v1672 = vld [vmem:[#allocation8 + $0x30] sm:$0xff]
    %v1673 = vld [vmem:[#allocation8 + $0x38] sm:$0xff]
    %v1674 = vld [vmem:[#allocation8 + $0x40] sm:$0xff]
    %v1675 = vld [vmem:[#allocation8 + $0x48] sm:$0xff]
    %v1676 = vld [vmem:[#allocation8 + $0x50] sm:$0xff]
    %v1677 = vld [vmem:[#allocation8 + $0x58] sm:$0xff]
    %v1678 = vld [vmem:[#allocation8 + $0x60] sm:$0xff]
    %v1679 = vld [vmem:[#allocation8 + $0x68] sm:$0xff]
    %v1680 = vld [vmem:[#allocation8 + $0x70] sm:$0xff]
    %v1681 = vld [vmem:[#allocation8 + $0x78] sm:$0xff]
    %v1682 = vld [vmem:[#allocation8 + $0x80] sm:$0xff]
    %v1683 = vld [vmem:[#allocation8 + $0x88] sm:$0xff]
    %v1684 = vld [vmem:[#allocation8 + $0x90] sm:$0xff]
    %v1685 = vld [vmem:[#allocation8 + $0x98] sm:$0xff]
    %v1686 = vld [vmem:[#allocation8 + $0xa0] sm:$0xff]
    %v1687 = vld [vmem:[#allocation8 + $0xa8] sm:$0xff]
    %v1688 = vld [vmem:[#allocation8 + $0xb0] sm:$0xff]
    %v1689 = vld [vmem:[#allocation8 + $0xb8] sm:$0xff]
    %v1690 = vld [vmem:[#allocation8 + $0xc0] sm:$0xff]
    %v1691 = vld [vmem:[#allocation8 + $0xc8] sm:$0xff]
    %v1692 = vld [vmem:[#allocation8 + $0xd0] sm:$0xff]
    %v1693 = vld [vmem:[#allocation8 + $0xd8] sm:$0xff]
    %v1694 = vld [vmem:[#allocation8 + $0xe0] sm:$0xff]
    %v1695 = vld [vmem:[#allocation8 + $0xe8] sm:$0xff]
    %v1696 = vld [vmem:[#allocation8 + $0xf0] sm:$0xff]
    %v1697 = vld [vmem:[#allocation8 + $0xf8] sm:$0xff]
    %v1698 = vld [vmem:[#allocation8 + $0x100] sm:$0xff]
    %v1699 = vld [vmem:[#allocation8 + $0x108] sm:$0xff]
    %v1700 = vld [vmem:[#allocation8 + $0x110] sm:$0xff]
    %v1701 = vld [vmem:[#allocation8 + $0x118] sm:$0xff]
    %v1702 = vld [vmem:[#allocation8 + $0x120] sm:$0xff]
    %v1703 = vld [vmem:[#allocation8 + $0x128] sm:$0xff]
    %v1704 = vld [vmem:[#allocation8 + $0x130] sm:$0xff]
    %v1705 = vld [vmem:[#allocation8 + $0x138] sm:$0xff]
    %v1706 = vld [vmem:[#allocation8 + $0x140] sm:$0xff]
    %v1707 = vld [vmem:[#allocation8 + $0x148] sm:$0xff]
    %v1708 = vld [vmem:[#allocation8 + $0x150] sm:$0xff]
    %v1709 = vld [vmem:[#allocation8 + $0x158] sm:$0xff]
    %v1710 = vld [vmem:[#allocation8 + $0x160] sm:$0xff]
    %v1711 = vld [vmem:[#allocation8 + $0x168] sm:$0xff]
    %v1712 = vld [vmem:[#allocation8 + $0x170] sm:$0xff]
    %v1713 = vld [vmem:[#allocation8 + $0x178] sm:$0xff]
    %v1714 = vld [vmem:[#allocation8 + $0x180] sm:$0xff]
    %v1715 = vld [vmem:[#allocation8 + $0x188] sm:$0xff]
    %v1716 = vld [vmem:[#allocation8 + $0x190] sm:$0xff]
    %v1717 = vld [vmem:[#allocation8 + $0x198] sm:$0xff]
    %v1718 = vld [vmem:[#allocation8 + $0x1a0] sm:$0xff]
    %v1719 = vld [vmem:[#allocation8 + $0x1a8] sm:$0xff]
    %v1720 = vld [vmem:[#allocation8 + $0x1b0] sm:$0xff]
    %v1721 = vld [vmem:[#allocation8 + $0x1b8] sm:$0xff]
    %v1722 = vld [vmem:[#allocation8 + $0x1c0] sm:$0xff]
    %v1723 = vld [vmem:[#allocation8 + $0x1c8] sm:$0xff]
    %v1724 = vld [vmem:[#allocation8 + $0x1d0] sm:$0xff]
    %v1725 = vld [vmem:[#allocation8 + $0x1d8] sm:$0xff]
    %v1726 = vld [vmem:[#allocation8 + $0x1e0] sm:$0xff]
    %v1727 = vld [vmem:[#allocation8 + $0x1e8] sm:$0xff]
    %v1728 = vld [vmem:[#allocation8 + $0x1f0] sm:$0xff]
    %v1729 = vld [vmem:[#allocation8 + $0x1f8] sm:$0xff]
    %v1730 = vld [vmem:[%s4] sm:$0x3]
    %v1732 = vlaneseq
    %v1733 = vshrl.u32 %v1732, 7
    %v1734 = vsub.s32 0, %v1733
    %v1735 = vrot.slane %v1730, %v1734
    %v1736 = vlaneseq
    %v1737 = vshrl.u32 %v1736, 7
    %v1738 = vsub.s32 1, %v1737
    %v1739 = vrot.slane %v1730, %v1738
    %v1806 = vunpack.c.l.b16 %v1666
    %v1807 = vunpack.c.h.b16 %v1666
    %v1808 = vunpack.c.l.b16 %v1667
    %v1809 = vunpack.c.h.b16 %v1667
    %v1810 = vunpack.c.l.b16 %v1668
    %v1811 = vunpack.c.h.b16 %v1668
    %v1812 = vunpack.c.l.b16 %v1669
    %v1813 = vunpack.c.h.b16 %v1669
    %v1814 = vunpack.c.l.b16 %v1670
    %v1815 = vunpack.c.h.b16 %v1670
    %v1816 = vunpack.c.l.b16 %v1671
    %v1817 = vunpack.c.h.b16 %v1671
    %v1818 = vunpack.c.l.b16 %v1672
    %v1819 = vunpack.c.h.b16 %v1672
    %v1820 = vunpack.c.l.b16 %v1673
    %v1821 = vunpack.c.h.b16 %v1673
    %v1822 = vunpack.c.l.b16 %v1674
    %v1823 = vunpack.c.h.b16 %v1674
    %v1824 = vunpack.c.l.b16 %v1675
    %v1825 = vunpack.c.h.b16 %v1675
    %v1826 = vunpack.c.l.b16 %v1676
    %v1827 = vunpack.c.h.b16 %v1676
    %v1828 = vunpack.c.l.b16 %v1677
    %v1829 = vunpack.c.h.b16 %v1677
    %v1830 = vunpack.c.l.b16 %v1678
    %v1831 = vunpack.c.h.b16 %v1678
    %v1832 = vunpack.c.l.b16 %v1679
    %v1833 = vunpack.c.h.b16 %v1679
    %v1834 = vunpack.c.l.b16 %v1680
    %v1835 = vunpack.c.h.b16 %v1680
    %v1836 = vunpack.c.l.b16 %v1681
    %v1837 = vunpack.c.h.b16 %v1681
    %v1838 = vunpack.c.l.b16 %v1682
    %v1839 = vunpack.c.h.b16 %v1682
    %v1840 = vunpack.c.l.b16 %v1683
    %v1841 = vunpack.c.h.b16 %v1683
    %v1842 = vunpack.c.l.b16 %v1684
    %v1843 = vunpack.c.h.b16 %v1684
    %v1844 = vunpack.c.l.b16 %v1685
    %v1845 = vunpack.c.h.b16 %v1685
    %v1846 = vunpack.c.l.b16 %v1686
    %v1847 = vunpack.c.h.b16 %v1686
    %v1848 = vunpack.c.l.b16 %v1687
    %v1849 = vunpack.c.h.b16 %v1687
    %v1850 = vunpack.c.l.b16 %v1688
    %v1851 = vunpack.c.h.b16 %v1688
    %v1852 = vunpack.c.l.b16 %v1689
    %v1853 = vunpack.c.h.b16 %v1689
    %v1854 = vunpack.c.l.b16 %v1690
    %v1855 = vunpack.c.h.b16 %v1690
    %v1856 = vunpack.c.l.b16 %v1691
    %v1857 = vunpack.c.h.b16 %v1691
    %v1858 = vunpack.c.l.b16 %v1692
    %v1859 = vunpack.c.h.b16 %v1692
    %v1860 = vunpack.c.l.b16 %v1693
    %v1861 = vunpack.c.h.b16 %v1693
    %v1862 = vunpack.c.l.b16 %v1694
    %v1863 = vunpack.c.h.b16 %v1694
    %v1864 = vunpack.c.l.b16 %v1695
    %v1865 = vunpack.c.h.b16 %v1695
    %v1866 = vunpack.c.l.b16 %v1696
    %v1867 = vunpack.c.h.b16 %v1696
    %v1868 = vunpack.c.l.b16 %v1697
    %v1869 = vunpack.c.h.b16 %v1697
    %v1870 = vunpack.c.l.b16 %v1698
    %v1871 = vunpack.c.h.b16 %v1698
    %v1872 = vunpack.c.l.b16 %v1699
    %v1873 = vunpack.c.h.b16 %v1699
    %v1874 = vunpack.c.l.b16 %v1700
    %v1875 = vunpack.c.h.b16 %v1700
    %v1876 = vunpack.c.l.b16 %v1701
    %v1877 = vunpack.c.h.b16 %v1701
    %v1878 = vunpack.c.l.b16 %v1702
    %v1879 = vunpack.c.h.b16 %v1702
    %v1880 = vunpack.c.l.b16 %v1703
    %v1881 = vunpack.c.h.b16 %v1703
    %v1882 = vunpack.c.l.b16 %v1704
    %v1883 = vunpack.c.h.b16 %v1704
    %v1884 = vunpack.c.l.b16 %v1705
    %v1885 = vunpack.c.h.b16 %v1705
    %v1886 = vunpack.c.l.b16 %v1706
    %v1887 = vunpack.c.h.b16 %v1706
    %v1888 = vunpack.c.l.b16 %v1707
    %v1889 = vunpack.c.h.b16 %v1707
    %v1890 = vunpack.c.l.b16 %v1708
    %v1891 = vunpack.c.h.b16 %v1708
    %v1892 = vunpack.c.l.b16 %v1709
    %v1893 = vunpack.c.h.b16 %v1709
    %v1894 = vunpack.c.l.b16 %v1710
    %v1895 = vunpack.c.h.b16 %v1710
    %v1896 = vunpack.c.l.b16 %v1711
    %v1897 = vunpack.c.h.b16 %v1711
    %v1898 = vunpack.c.l.b16 %v1712
    %v1899 = vunpack.c.h.b16 %v1712
    %v1900 = vunpack.c.l.b16 %v1713
    %v1901 = vunpack.c.h.b16 %v1713
    %v1902 = vunpack.c.l.b16 %v1714
    %v1903 = vunpack.c.h.b16 %v1714
    %v1904 = vunpack.c.l.b16 %v1715
    %v1905 = vunpack.c.h.b16 %v1715
    %v1906 = vunpack.c.l.b16 %v1716
    %v1907 = vunpack.c.h.b16 %v1716
    %v1908 = vunpack.c.l.b16 %v1717
    %v1909 = vunpack.c.h.b16 %v1717
    %v1910 = vunpack.c.l.b16 %v1718
    %v1911 = vunpack.c.h.b16 %v1718
    %v1912 = vunpack.c.l.b16 %v1719
    %v1913 = vunpack.c.h.b16 %v1719
    %v1914 = vunpack.c.l.b16 %v1720
    %v1915 = vunpack.c.h.b16 %v1720
    %v1916 = vunpack.c.l.b16 %v1721
    %v1917 = vunpack.c.h.b16 %v1721
    %v1918 = vunpack.c.l.b16 %v1722
    %v1919 = vunpack.c.h.b16 %v1722
    %v1920 = vunpack.c.l.b16 %v1723
    %v1921 = vunpack.c.h.b16 %v1723
    %v1922 = vunpack.c.l.b16 %v1724
    %v1923 = vunpack.c.h.b16 %v1724
    %v1924 = vunpack.c.l.b16 %v1725
    %v1925 = vunpack.c.h.b16 %v1725
    %v1926 = vunpack.c.l.b16 %v1726
    %v1927 = vunpack.c.h.b16 %v1726
    %v1928 = vunpack.c.l.b16 %v1727
    %v1929 = vunpack.c.h.b16 %v1727
    %v1930 = vunpack.c.l.b16 %v1728
    %v1931 = vunpack.c.h.b16 %v1728
    %v1932 = vunpack.c.l.b16 %v1729
    %v1933 = vunpack.c.h.b16 %v1729
    %v1934 = vpack.c.b16 %v1808, %v1806
    %v1935 = vpack.c.b16 %v1809, %v1807
    %v1936 = vpack.c.b16 %v1812, %v1810
    %v1937 = vpack.c.b16 %v1813, %v1811
    %v1938 = vpack.c.b16 %v1816, %v1814
    %v1939 = vpack.c.b16 %v1817, %v1815
    %v1940 = vpack.c.b16 %v1820, %v1818
    %v1941 = vpack.c.b16 %v1821, %v1819
    %v1942 = vpack.c.b16 %v1824, %v1822
    %v1943 = vpack.c.b16 %v1825, %v1823
    %v1944 = vpack.c.b16 %v1828, %v1826
    %v1945 = vpack.c.b16 %v1829, %v1827
    %v1946 = vpack.c.b16 %v1832, %v1830
    %v1947 = vpack.c.b16 %v1833, %v1831
    %v1948 = vpack.c.b16 %v1836, %v1834
    %v1949 = vpack.c.b16 %v1837, %v1835
    %v1950 = vpack.c.b16 %v1840, %v1838
    %v1951 = vpack.c.b16 %v1841, %v1839
    %v1952 = vpack.c.b16 %v1844, %v1842
    %v1953 = vpack.c.b16 %v1845, %v1843
    %v1954 = vpack.c.b16 %v1848, %v1846
    %v1955 = vpack.c.b16 %v1849, %v1847
    %v1956 = vpack.c.b16 %v1852, %v1850
    %v1957 = vpack.c.b16 %v1853, %v1851
    %v1958 = vpack.c.b16 %v1856, %v1854
    %v1959 = vpack.c.b16 %v1857, %v1855
    %v1960 = vpack.c.b16 %v1860, %v1858
    %v1961 = vpack.c.b16 %v1861, %v1859
    %v1962 = vpack.c.b16 %v1864, %v1862
    %v1963 = vpack.c.b16 %v1865, %v1863
    %v1964 = vpack.c.b16 %v1868, %v1866
    %v1965 = vpack.c.b16 %v1869, %v1867
    %v1966 = vpack.c.b16 %v1872, %v1870
    %v1967 = vpack.c.b16 %v1873, %v1871
    %v1968 = vpack.c.b16 %v1876, %v1874
    %v1969 = vpack.c.b16 %v1877, %v1875
    %v1970 = vpack.c.b16 %v1880, %v1878
    %v1971 = vpack.c.b16 %v1881, %v1879
    %v1972 = vpack.c.b16 %v1884, %v1882
    %v1973 = vpack.c.b16 %v1885, %v1883
    %v1974 = vpack.c.b16 %v1888, %v1886
    %v1975 = vpack.c.b16 %v1889, %v1887
    %v1976 = vpack.c.b16 %v1892, %v1890
    %v1977 = vpack.c.b16 %v1893, %v1891
    %v1978 = vpack.c.b16 %v1896, %v1894
    %v1979 = vpack.c.b16 %v1897, %v1895
    %v1980 = vpack.c.b16 %v1900, %v1898
    %v1981 = vpack.c.b16 %v1901, %v1899
    %v1982 = vpack.c.b16 %v1904, %v1902
    %v1983 = vpack.c.b16 %v1905, %v1903
    %v1984 = vpack.c.b16 %v1908, %v1906
    %v1985 = vpack.c.b16 %v1909, %v1907
    %v1986 = vpack.c.b16 %v1912, %v1910
    %v1987 = vpack.c.b16 %v1913, %v1911
    %v1988 = vpack.c.b16 %v1916, %v1914
    %v1989 = vpack.c.b16 %v1917, %v1915
    %v1990 = vpack.c.b16 %v1920, %v1918
    %v1991 = vpack.c.b16 %v1921, %v1919
    %v1992 = vpack.c.b16 %v1924, %v1922
    %v1993 = vpack.c.b16 %v1925, %v1923
    %v1994 = vpack.c.b16 %v1928, %v1926
    %v1995 = vpack.c.b16 %v1929, %v1927
    %v1996 = vpack.c.b16 %v1932, %v1930
    %v1997 = vpack.c.b16 %v1933, %v1931
    %2062 = vmatprep.subr.bf16.mxu0 %v1949
    %2063 = vmatpush1.bf16.msra.mxu0 %v1948
    %2064 = vmatprep.subr.bf16.mxu0 %v1947
    %2065 = vmatpush1.bf16.msra.mxu0 %v1946
    %2066 = vmatprep.subr.bf16.mxu0 %v1945
    %2067 = vmatpush1.bf16.msra.mxu0 %v1944
    %2068 = vmatprep.subr.bf16.mxu0 %v1943
    %2069 = vmatpush1.bf16.msra.mxu0 %v1942
    %2070 = vmatprep.subr.bf16.mxu0 %v1941
    %2071 = vmatpush1.bf16.msra.mxu0 %v1940
    %2072 = vmatprep.subr.bf16.mxu0 %v1939
    %2073 = vmatpush1.bf16.msra.mxu0 %v1938
    %2074 = vmatprep.subr.bf16.mxu0 %v1937
    %2075 = vmatpush1.bf16.msra.mxu0 %v1936
    %2076 = vmatprep.subr.bf16.mxu0 %v1935
    %2077 = vmatpush1.bf16.msra.mxu0 %v1934
    %2078 = vmatprep.subr.bf16.mxu0 %v1965
    %2079 = vmatpush2.bf16.msra.mxu0 %v1964
    %2080 = vmatprep.subr.bf16.mxu0 %v1963
    %2081 = vmatpush2.bf16.msra.mxu0 %v1962
    %2082 = vmatprep.subr.bf16.mxu0 %v1961
    %2083 = vmatpush2.bf16.msra.mxu0 %v1960
    %2084 = vmatprep.subr.bf16.mxu0 %v1959
    %2085 = vmatpush2.bf16.msra.mxu0 %v1958
    %2086 = vmatprep.subr.bf16.mxu0 %v1957
    %2087 = vmatpush2.bf16.msra.mxu0 %v1956
    %2088 = vmatprep.subr.bf16.mxu0 %v1955
    %2089 = vmatpush2.bf16.msra.mxu0 %v1954
    %2090 = vmatprep.subr.bf16.mxu0 %v1953
    %2091 = vmatpush2.bf16.msra.mxu0 %v1952
    %2092 = vmatprep.subr.bf16.mxu0 %v1951
    %2093 = vmatpush2.bf16.msra.mxu0 %v1950
    %2094 = vmatprep.mubr.bf16.mxu0 %v1663
    %2095 = vmatmul.mubr.bf16.gmra.mxu0 %v1662
    %v2096 = vpop.f32.mrf.mxu0
    %v2097 = vadd.f32 %v1735, %v2096
    %v2098 = vpop.f32.mrf.mxu0
    %v2099 = vadd.f32 %v1739, %v2098
    %v2100 = vpop.f32.mrf.mxu0
    %v2101 = vpop.f32.mrf.mxu0
    %2102 = vdwg.mxu0
    %2103 = vmatprep.subr.bf16.mxu0 %v1981
    %2104 = vmatpush1.bf16.msra.mxu0 %v1980
    %2105 = vmatprep.subr.bf16.mxu0 %v1979
    %2106 = vmatpush1.bf16.msra.mxu0 %v1978
    %2107 = vmatprep.subr.bf16.mxu0 %v1977
    %2108 = vmatpush1.bf16.msra.mxu0 %v1976
    %2109 = vmatprep.subr.bf16.mxu0 %v1975
    %2110 = vmatpush1.bf16.msra.mxu0 %v1974
    %2111 = vmatprep.subr.bf16.mxu0 %v1973
    %2112 = vmatpush1.bf16.msra.mxu0 %v1972
    %2113 = vmatprep.subr.bf16.mxu0 %v1971
    %2114 = vmatpush1.bf16.msra.mxu0 %v1970
    %2115 = vmatprep.subr.bf16.mxu0 %v1969
    %2116 = vmatpush1.bf16.msra.mxu0 %v1968
    %2117 = vmatprep.subr.bf16.mxu0 %v1967
    %2118 = vmatpush1.bf16.msra.mxu0 %v1966
    %2119 = vmatprep.subr.bf16.mxu0 %v1997
    %2120 = vmatpush2.bf16.msra.mxu0 %v1996
    %2121 = vmatprep.subr.bf16.mxu0 %v1995
    %2122 = vmatpush2.bf16.msra.mxu0 %v1994
    %2123 = vmatprep.subr.bf16.mxu0 %v1993
    %2124 = vmatpush2.bf16.msra.mxu0 %v1992
    %2125 = vmatprep.subr.bf16.mxu0 %v1991
    %2126 = vmatpush2.bf16.msra.mxu0 %v1990
    %2127 = vmatprep.subr.bf16.mxu0 %v1989
    %2128 = vmatpush2.bf16.msra.mxu0 %v1988
    %2129 = vmatprep.subr.bf16.mxu0 %v1987
    %2130 = vmatpush2.bf16.msra.mxu0 %v1986
    %2131 = vmatprep.subr.bf16.mxu0 %v1985
    %2132 = vmatpush2.bf16.msra.mxu0 %v1984
    %2133 = vmatprep.subr.bf16.mxu0 %v1983
    %2134 = vmatpush2.bf16.msra.mxu0 %v1982
    %2135 = vmatprep.mubr.bf16.mxu0 %v1665
    %2136 = vmatmul.mubr.bf16.gmra.mxu0 %v1664
    %v2137 = vpop.f32.mrf.mxu0
    %v2138 = vadd.f32 %v2097, %v2137
    %v2139 = vpop.f32.mrf.mxu0
    %v2140 = vadd.f32 %v2099, %v2139
    %v2141 = vpop.f32.mrf.mxu0
    %v2142 = vpop.f32.mrf.mxu0
    %2143 = vdwg.mxu0
    %vm2144 = vcmp.gt.f32.partialorder %v2138, 0.0
    %vm2145 = vcmp.gt.f32.partialorder %v2140, 0.0
    %v2146 = vmul.f32 %v2138, 0.2
    %v2147 = vmul.f32 %v2140, 0.2
    %v2148 = vsel %vm2144, %v2138, %v2146
    %v2149 = vsel %vm2145, %v2140, %v2147
    %v2150 = vpack.c.bf16 %v2148, %v2148
    %v2151 = vpack.c.bf16 %v2149, %v2149
    %v2152 = vld [vmem:[#allocation10] sm:$0xf]
    %v2153 = vld [vmem:[#allocation10 + $0x4] sm:$0xf]
    %v2154 = vld [vmem:[#allocation10 + $0x8] sm:$0xf]
    %v2155 = vld [vmem:[#allocation10 + $0xc] sm:$0xf]
    %v2156 = vld [vmem:[#allocation10 + $0x10] sm:$0xf]
    %v2157 = vld [vmem:[#allocation10 + $0x14] sm:$0xf]
    %v2158 = vld [vmem:[#allocation10 + $0x18] sm:$0xf]
    %v2159 = vld [vmem:[#allocation10 + $0x1c] sm:$0xf]
    %v2160 = vld [vmem:[#allocation10 + $0x20] sm:$0xf]
    %v2161 = vld [vmem:[#allocation10 + $0x24] sm:$0xf]
    %v2162 = vld [vmem:[#allocation10 + $0x28] sm:$0xf]
    %v2163 = vld [vmem:[#allocation10 + $0x2c] sm:$0xf]
    %v2164 = vld [vmem:[#allocation10 + $0x30] sm:$0xf]
    %v2165 = vld [vmem:[#allocation10 + $0x34] sm:$0xf]
    %v2166 = vld [vmem:[#allocation10 + $0x38] sm:$0xf]
    %v2167 = vld [vmem:[#allocation10 + $0x3c] sm:$0xf]
    %v2168 = vld [vmem:[#allocation10 + $0x40] sm:$0xf]
    %v2169 = vld [vmem:[#allocation10 + $0x44] sm:$0xf]
    %v2170 = vld [vmem:[#allocation10 + $0x48] sm:$0xf]
    %v2171 = vld [vmem:[#allocation10 + $0x4c] sm:$0xf]
    %v2172 = vld [vmem:[#allocation10 + $0x50] sm:$0xf]
    %v2173 = vld [vmem:[#allocation10 + $0x54] sm:$0xf]
    %v2174 = vld [vmem:[#allocation10 + $0x58] sm:$0xf]
    %v2175 = vld [vmem:[#allocation10 + $0x5c] sm:$0xf]
    %v2176 = vld [vmem:[#allocation10 + $0x60] sm:$0xf]
    %v2177 = vld [vmem:[#allocation10 + $0x64] sm:$0xf]
    %v2178 = vld [vmem:[#allocation10 + $0x68] sm:$0xf]
    %v2179 = vld [vmem:[#allocation10 + $0x6c] sm:$0xf]
    %v2180 = vld [vmem:[#allocation10 + $0x70] sm:$0xf]
    %v2181 = vld [vmem:[#allocation10 + $0x74] sm:$0xf]
    %v2182 = vld [vmem:[#allocation10 + $0x78] sm:$0xf]
    %v2183 = vld [vmem:[#allocation10 + $0x7c] sm:$0xf]
    %v2184 = vld [vmem:[%s6] sm:$0x1]
    %v2186 = vlaneseq
    %v2187 = vshrl.u32 %v2186, 7
    %v2188 = vsub.s32 0, %v2187
    %v2189 = vrot.slane %v2184, %v2188
    %v2223 = vunpack.c.l.b16 %v2152
    %v2224 = vunpack.c.l.b16 %v2153
    %v2225 = vunpack.c.l.b16 %v2154
    %v2226 = vunpack.c.l.b16 %v2155
    %v2227 = vunpack.c.l.b16 %v2156
    %v2228 = vunpack.c.l.b16 %v2157
    %v2229 = vunpack.c.l.b16 %v2158
    %v2230 = vunpack.c.l.b16 %v2159
    %v2231 = vunpack.c.l.b16 %v2160
    %v2232 = vunpack.c.l.b16 %v2161
    %v2233 = vunpack.c.l.b16 %v2162
    %v2234 = vunpack.c.l.b16 %v2163
    %v2235 = vunpack.c.l.b16 %v2164
    %v2236 = vunpack.c.l.b16 %v2165
    %v2237 = vunpack.c.l.b16 %v2166
    %v2238 = vunpack.c.l.b16 %v2167
    %v2239 = vunpack.c.l.b16 %v2168
    %v2240 = vunpack.c.l.b16 %v2169
    %v2241 = vunpack.c.l.b16 %v2170
    %v2242 = vunpack.c.l.b16 %v2171
    %v2243 = vunpack.c.l.b16 %v2172
    %v2244 = vunpack.c.l.b16 %v2173
    %v2245 = vunpack.c.l.b16 %v2174
    %v2246 = vunpack.c.l.b16 %v2175
    %v2247 = vunpack.c.l.b16 %v2176
    %v2248 = vunpack.c.l.b16 %v2177
    %v2249 = vunpack.c.l.b16 %v2178
    %v2250 = vunpack.c.l.b16 %v2179
    %v2251 = vunpack.c.l.b16 %v2180
    %v2252 = vunpack.c.l.b16 %v2181
    %v2253 = vunpack.c.l.b16 %v2182
    %v2254 = vunpack.c.l.b16 %v2183
    %v2255 = vpack.c.b16 %v2224, %v2223
    %v2256 = vpack.c.b16 %v2226, %v2225
    %v2257 = vpack.c.b16 %v2228, %v2227
    %v2258 = vpack.c.b16 %v2230, %v2229
    %v2259 = vpack.c.b16 %v2232, %v2231
    %v2260 = vpack.c.b16 %v2234, %v2233
    %v2261 = vpack.c.b16 %v2236, %v2235
    %v2262 = vpack.c.b16 %v2238, %v2237
    %v2263 = vpack.c.b16 %v2240, %v2239
    %v2264 = vpack.c.b16 %v2242, %v2241
    %v2265 = vpack.c.b16 %v2244, %v2243
    %v2266 = vpack.c.b16 %v2246, %v2245
    %v2267 = vpack.c.b16 %v2248, %v2247
    %v2268 = vpack.c.b16 %v2250, %v2249
    %v2269 = vpack.c.b16 %v2252, %v2251
    %v2270 = vpack.c.b16 %v2254, %v2253
    %2287 = vmatprep.subr.bf16.mxu0 0
    %2288 = vmatpush1.bf16.msra.mxu0 %v2262
    %2289 = vmatprep.subr.bf16.mxu0 0
    %2290 = vmatpush1.bf16.msra.mxu0 %v2261
    %2291 = vmatprep.subr.bf16.mxu0 0
    %2292 = vmatpush1.bf16.msra.mxu0 %v2260
    %2293 = vmatprep.subr.bf16.mxu0 0
    %2294 = vmatpush1.bf16.msra.mxu0 %v2259
    %2295 = vmatprep.subr.bf16.mxu0 0
    %2296 = vmatpush1.bf16.msra.mxu0 %v2258
    %2297 = vmatprep.subr.bf16.mxu0 0
    %2298 = vmatpush1.bf16.msra.mxu0 %v2257
    %2299 = vmatprep.subr.bf16.mxu0 0
    %2300 = vmatpush1.bf16.msra.mxu0 %v2256
    %2301 = vmatprep.subr.bf16.mxu0 0
    %2302 = vmatpush1.bf16.msra.mxu0 %v2255
    %2303 = vmatprep.subr.bf16.mxu0 0
    %2304 = vmatpush2.bf16.msra.mxu0 %v2270
    %2305 = vmatprep.subr.bf16.mxu0 0
    %2306 = vmatpush2.bf16.msra.mxu0 %v2269
    %2307 = vmatprep.subr.bf16.mxu0 0
    %2308 = vmatpush2.bf16.msra.mxu0 %v2268
    %2309 = vmatprep.subr.bf16.mxu0 0
    %2310 = vmatpush2.bf16.msra.mxu0 %v2267
    %2311 = vmatprep.subr.bf16.mxu0 0
    %2312 = vmatpush2.bf16.msra.mxu0 %v2266
    %2313 = vmatprep.subr.bf16.mxu0 0
    %2314 = vmatpush2.bf16.msra.mxu0 %v2265
    %2315 = vmatprep.subr.bf16.mxu0 0
    %2316 = vmatpush2.bf16.msra.mxu0 %v2264
    %2317 = vmatprep.subr.bf16.mxu0 0
    %2318 = vmatpush2.bf16.msra.mxu0 %v2263
    %2319 = vmatprep.mubr.bf16.mxu0 %v2151
    %2320 = vmatmul.mubr.bf16.gmra.mxu0 %v2150
    %v2321 = vpop.f32.mrf.mxu0
    %v2322 = vadd.f32 %v2189, %v2321
    %v2323 = vpop.f32.mrf.mxu0
    %v2324 = vpop.f32.mrf.mxu0
    %v2325 = vpop.f32.mrf.mxu0
    %2326 = vdwg.mxu0
    %v2327 = vxor.u32 %v2322, 2147483648
    %v2328 = vmul.f32 %v2327, 1.442695
    %v2329 = vpow.pop %v2328
    %v2330 = vadd.f32 %v2329, 1.0
    %v2331 = vrcp.pop %v2330
    %v2332 = vmul.f32 1.0, %v2331
    %2333 = vst [vmem:[#allocation11] sm:$0xff] %v2332
    // Predicated region
    $region50: #{tpu_custom_call.1} parent=1 // pred_check
      _
    $region51: #{tpu_custom_call.1} parent=1 // pred_check_branch
      %2335 = sbr.rel (0) target = $region53
    $region52: #{tpu_custom_call.1} parent=1 // pred_region
      %s2337 = ssub.s32 128, 128
      %2338 = vsyncadd [#allocation4], %s2337
      %s2340 = sshll.u32 [#allocation11], 4
      %s2341 = int_to_ptr.vmem [resolvable:$true] %s2340
      %2343 = dma.vmem_to_hbm [thread:$0]  %s2341, 128, %s7, [#allocation4]
    $region53: #{tpu_custom_call.1} parent=1 // pred_fallthru
      _
    // Predicated region
    $region54: #{tpu_custom_call.1} parent=1 // pred_check
      _
    $region55: #{tpu_custom_call.1} parent=1 // pred_check_branch
      %2345 = sbr.rel (0) target = $region57
    $region56: #{tpu_custom_call.1} parent=1 // pred_region
      %2346 = dma.done [#allocation4], 128
    $region57: #{tpu_custom_call.1} parent=1 // pred_fallthru
      _
    %2347 = vsyncpa [#allocation3], 1
    %2348 = vsyncpa [#allocation6], 1
    %2349 = vsyncpa [#allocation9], 1
    %2350 = vsyncpa [#allocation4], 1

</llo_original>
